<compile_context>
chip_gen: v7x
topology: tpu7x:2x2x1
jax: 0.10.0
libtpu: 0.0.40
codegen_flags: <defaults>
</compile_context>

<pallas_src>
import functools
import numpy as np

import jax
import jax.numpy as jnp
from jax import lax
from jax.experimental import pallas as pl
from jax.experimental.pallas import tpu as pltpu

_INV_SQRT2 = 0.7071067811865476


def _erf_approx(x):
    # Abramowitz & Stegun 7.1.26, max abs error ~1.5e-7; only abs/mul/add/div/exp/
    # select so it lowers cleanly in Mosaic (exp goes to the otherwise-idle EUP).
    p = 0.3275911
    a1, a2, a3, a4, a5 = 0.254829592, -0.284496736, 1.421413741, -1.453152027, 1.061405429
    ax = jnp.abs(x)
    t = 1.0 / (1.0 + p * ax)
    poly = ((((a5 * t + a4) * t + a3) * t + a2) * t + a1) * t
    y = 1.0 - poly * jnp.exp(-ax * ax)
    return jnp.where(x >= 0.0, y, -y)


def _gelu(x):
    # exact (erf-based) GELU, matching torch.nn.functional.gelu default
    return 0.5 * x * (1.0 + _erf_approx(x * _INV_SQRT2))


def _conv5_fused(g_bf16, w_l):
    """'same' conv, kernel=5, stride=1, pad=2, along the lane (time) axis as ONE matmul.

    g_bf16: (C, T) bf16 activations. w_l: (C_out, 5*C) bf16 tap-stacked weights.
    Builds a zero-padded im2col slab (5*C, T) where row-block k holds x[:, t + k - 2].
    """
    C, T = g_bf16.shape
    zpad = jnp.zeros((C, 2), jnp.bfloat16)
    gp = jnp.concatenate([zpad, g_bf16, zpad], axis=1)                 # (C, T + 4)
    taps = [g_bf16 if k == 2 else gp[:, k:k + T] for k in range(5)]    # 5 x (C, T)
    im2col = jnp.concatenate(taps, axis=0)                             # (5*C, T)
    return jnp.dot(w_l, im2col, preferred_element_type=jnp.float32)    # (C_out, T) f32


def _content_encoder_kernel(num_layers,
                            x_ref, win_ref, bin_ref,
                            w1_ref, b1_ref, w2_ref, b2_ref,
                            wout_ref, bout_ref, o_ref):
    # x block: (1, C_in, T) f32 -> (C_in, T) bf16 for the MXU
    x = x_ref[0].astype(jnp.bfloat16)

    # input_layer: Conv1d(C_in, C_int, 1) == (C_int, C_in) @ (C_in, T) + bias
    h = jnp.dot(win_ref[...], x, preferred_element_type=jnp.float32) + bin_ref[...]

    def body(l, h):
        g1 = _gelu(h).astype(jnp.bfloat16)
        c1 = _conv5_fused(g1, w1_ref[l]) + b1_ref[l]
        g2 = _gelu(c1).astype(jnp.bfloat16)
        c2 = _conv5_fused(g2, w2_ref[l]) + b2_ref[l]
        return c2 + h                                   # residual add in f32

    h = lax.fori_loop(0, num_layers, body, h)

    # output_layer: Conv1d(C_int, bottleneck, 1); result (bott, T) is lane-dense
    out = jnp.dot(wout_ref[...], h.astype(jnp.bfloat16),
                  preferred_element_type=jnp.float32) + bout_ref[...]
    o_ref[0] = out.astype(o_ref.dtype)


def pack_params(torch_params):
    """PyTorch-layout params -> kernel layout (bf16 weights, f32 biases)."""
    (w_in, b_in, w1, b1, w2, b2, w_out, b_out) = torch_params
    L, C, _, K = w1.shape

    def stack(w):  # (L, C_out, C_in, 5) -> (L, C_out, 5*C_in), tap-major columns
        return jnp.transpose(w, (0, 1, 3, 2)).reshape(L, w.shape[1], K * w.shape[2]
                                                      ).astype(jnp.bfloat16)

    win_k = w_in[:, :, 0].astype(jnp.bfloat16)            # (C_int, C_in)
    bin_k = b_in.reshape(-1, 1).astype(jnp.float32)       # (C_int, 1)
    w1_k, w2_k = stack(w1), stack(w2)                     # (L, C_int, 5*C_int)
    b1_k = b1.reshape(L, -1, 1).astype(jnp.float32)       # (L, C_int, 1)
    b2_k = b2.reshape(L, -1, 1).astype(jnp.float32)
    wout_k = w_out[:, :, 0].astype(jnp.bfloat16)          # (bott, C_int)
    bout_k = b_out.reshape(-1, 1).astype(jnp.float32)     # (bott, 1)
    return (win_k, bin_k, w1_k, b1_k, w2_k, b2_k, wout_k, bout_k)


def content_encoder(x_nct, packed):
    """x_nct: (B, C_in, T) PyTorch NCW. Returns (B, bottleneck, T) f32."""
    win, bin_, w1, b1, w2, b2, wout, bout = packed
    B, C_in, T = x_nct.shape
    bott = wout.shape[0]
    L = w1.shape[0]

    kernel = functools.partial(_content_encoder_kernel, L)

    def full(a):
        return pl.BlockSpec(a.shape, lambda b, _nd=a.ndim: (0,) * _nd)

    return pl.pallas_call(
        kernel,
        out_shape=jax.ShapeDtypeStruct((B, bott, T), jnp.float32),
        grid_spec=pltpu.PrefetchScalarGridSpec(
            num_scalar_prefetch=0,
            grid=(B,),
            in_specs=[
                pl.BlockSpec((1, C_in, T), lambda b: (b, 0, 0)),
                full(win), full(bin_),
                full(w1), full(b1), full(w2), full(b2),
                full(wout), full(bout),
            ],
            out_specs=pl.BlockSpec((1, bott, T), lambda b: (b, 0, 0)),
        ),
        compiler_params=pltpu.CompilerParams(
            dimension_semantics=("parallel",),        # batch items are independent
            vmem_limit_bytes=64 * 1024 * 1024,
        ),
    )(x_nct, win, bin_, w1, b1, w2, b2, wout, bout)


def init_params(key, c_in, c_int, bottleneck, num_layers):
    """Deterministic synthetic parameters in PyTorch state_dict layouts."""
    keys = jax.random.split(key, 8)

    def nrm(k, shape, fan_in):
        return jax.random.normal(k, shape, jnp.float32) / jnp.sqrt(float(fan_in))

    w_in = nrm(keys[0], (c_int, c_in, 1), c_in)                    # input_layer.weight
    b_in = nrm(keys[1], (c_int,), c_in)                            # input_layer.bias
    w1 = nrm(keys[2], (num_layers, c_int, c_int, 5), 5 * c_int)    # resblock conv1
    b1 = nrm(keys[3], (num_layers, c_int), 5 * c_int)
    w2 = nrm(keys[4], (num_layers, c_int, c_int, 5), 5 * c_int)    # resblock conv2
    b2 = nrm(keys[5], (num_layers, c_int), 5 * c_int)
    w_out = nrm(keys[6], (bottleneck, c_int, 1), c_int)            # output_layer.weight
    b_out = nrm(keys[7], (bottleneck,), c_int)
    return (w_in, b_in, w1, b1, w2, b2, w_out, b_out)


def ref_forward(x_nct, torch_params):
    """Pure-JAX f32 reference mirroring the PyTorch forward (NCW conv1d semantics)."""
    (w_in, b_in, w1, b1, w2, b2, w_out, b_out) = torch_params

    def conv1d(x, w, b, pad):
        y = lax.conv_general_dilated(x, w, window_strides=(1,), padding=[(pad, pad)],
                                     dimension_numbers=("NCH", "OIH", "NCH"))
        return y + b[None, :, None]

    gelu = lambda v: jax.nn.gelu(v, approximate=False)
    h = conv1d(x_nct, w_in, b_in, 0)
    for l in range(w1.shape[0]):
        g = gelu(h)
        c1 = conv1d(g, w1[l], b1[l], 2)
        g2 = gelu(c1)
        c2 = conv1d(g2, w2[l], b2[l], 2)
        h = c2 + h
    return conv1d(h, w_out, b_out, 0)


if __name__ == "__main__":
    # Small shapes consistent with the module (constructor defaults shrunk for the demo;
    # T=128 keeps the time axis lane-dense).
    B, C_IN, C_INT, BOTT, L, T = 2, 16, 32, 4, 2, 128

    key = jax.random.PRNGKey(0)
    kx, kp = jax.random.split(key)
    x = jax.random.normal(kx, (B, C_IN, T), jnp.float32)      # PyTorch NCW input
    torch_params = init_params(kp, C_IN, C_INT, BOTT, L)
    packed = pack_params(torch_params)

    out = content_encoder(x, packed)
    out = jax.block_until_ready(out)
    assert out.shape == (B, BOTT, T)

    # bf16 MXU operands -> relaxed tolerance vs the f32 reference.
    ref = ref_forward(x, torch_params)
    np.testing.assert_allclose(np.asarray(out), np.asarray(ref), rtol=5e-2, atol=5e-2)

    print("KERNEL_OK")
</pallas_src>

<mosaic_0001>
module attributes {stable_mosaic.version = 11 : i64} {
  func.func @_content_encoder_kernel(%arg0: i32, %arg1: memref<1x16x128xf32, #tpu.memory_space<vmem>>, %arg2: memref<32x16xbf16, #tpu.memory_space<vmem>>, %arg3: memref<32x1xf32, #tpu.memory_space<vmem>>, %arg4: memref<2x32x160xbf16, #tpu.memory_space<vmem>>, %arg5: memref<2x32x1xf32, #tpu.memory_space<vmem>>, %arg6: memref<2x32x160xbf16, #tpu.memory_space<vmem>>, %arg7: memref<2x32x1xf32, #tpu.memory_space<vmem>>, %arg8: memref<4x32xbf16, #tpu.memory_space<vmem>>, %arg9: memref<4x1xf32, #tpu.memory_space<vmem>>, %arg10: memref<1x4x128xf32, #tpu.memory_space<vmem>>) attributes {dimension_semantics = [#tpu.dimension_semantics<parallel>], iteration_bounds = array<i64: 2>, scalar_prefetch = 0 : i64, scratch_operands = 0 : i64, tpu.core_type = #tpu.core_type<tc>, window_params = [{transform_indices = @transform_0, window_bounds = array<i64: 1, 16, 128>}, {pipeline_mode = #tpu.pipeline_mode<synchronous>, transform_indices = @transform_1, window_bounds = array<i64: 32, 16>}, {pipeline_mode = #tpu.pipeline_mode<synchronous>, transform_indices = @transform_2, window_bounds = array<i64: 32, 1>}, {pipeline_mode = #tpu.pipeline_mode<synchronous>, transform_indices = @transform_3, window_bounds = array<i64: 2, 32, 160>}, {pipeline_mode = #tpu.pipeline_mode<synchronous>, transform_indices = @transform_4, window_bounds = array<i64: 2, 32, 1>}, {pipeline_mode = #tpu.pipeline_mode<synchronous>, transform_indices = @transform_5, window_bounds = array<i64: 2, 32, 160>}, {pipeline_mode = #tpu.pipeline_mode<synchronous>, transform_indices = @transform_6, window_bounds = array<i64: 2, 32, 1>}, {pipeline_mode = #tpu.pipeline_mode<synchronous>, transform_indices = @transform_7, window_bounds = array<i64: 4, 32>}, {pipeline_mode = #tpu.pipeline_mode<synchronous>, transform_indices = @transform_8, window_bounds = array<i64: 4, 1>}, {transform_indices = @transform_9, window_bounds = array<i64: 1, 4, 128>}]} {
    %c0 = arith.constant 0 : index
    %c0_0 = arith.constant 0 : index
    %c0_1 = arith.constant 0 : index
    %0 = vector.load %arg1[%c0, %c0_0, %c0_1] : memref<1x16x128xf32, #tpu.memory_space<vmem>>, vector<1x16x128xf32>
    %1 = vector.shape_cast %0 : vector<1x16x128xf32> to vector<16x128xf32>
    %2 = arith.truncf %1 : vector<16x128xf32> to vector<16x128xbf16>
    %c0_2 = arith.constant 0 : index
    %c0_3 = arith.constant 0 : index
    %3 = vector.load %arg2[%c0_2, %c0_3] : memref<32x16xbf16, #tpu.memory_space<vmem>>, vector<32x16xbf16>
    %cst = arith.constant dense<0.000000e+00> : vector<32x128xf32>
    %4 = tpu.matmul %3, %2, %cst {dimension_numbers = #tpu.dot_dimension_numbers<[1], [0], [0], [1], [0, 0, 1, 1], [], []>} : vector<32x16xbf16>, vector<16x128xbf16>, vector<32x128xf32> -> vector<32x128xf32>
    %c0_4 = arith.constant 0 : index
    %c0_5 = arith.constant 0 : index
    %5 = vector.load %arg3[%c0_4, %c0_5] : memref<32x1xf32, #tpu.memory_space<vmem>>, vector<32x1xf32>
    %6 = vector.broadcast %5 : vector<32x1xf32> to vector<32x128xf32>
    %7 = arith.addf %4, %6 : vector<32x128xf32>
    %c0_i32 = arith.constant 0 : i32
    %c2_i32 = arith.constant 2 : i32
    %8 = arith.addi %c0_i32, %c2_i32 : i32
    %c1_i32 = arith.constant 1 : i32
    %9 = scf.for %arg11 = %c0_i32 to %8 step %c1_i32 iter_args(%arg12 = %7) -> (vector<32x128xf32>)  : i32 {
      %cst_15 = arith.constant 5.000000e-01 : f32
      %19 = vector.broadcast %cst_15 : f32 to vector<32x128xf32>
      %20 = arith.mulf %19, %arg12 : vector<32x128xf32>
      %cst_16 = arith.constant 0.707106769 : f32
      %21 = vector.broadcast %cst_16 : f32 to vector<32x128xf32>
      %22 = arith.mulf %arg12, %21 : vector<32x128xf32>
      %23 = math.absf %22 : vector<32x128xf32>
      %cst_17 = arith.constant 0.327591091 : f32
      %24 = vector.broadcast %cst_17 : f32 to vector<32x128xf32>
      %25 = arith.mulf %24, %23 : vector<32x128xf32>
      %cst_18 = arith.constant 1.000000e+00 : f32
      %26 = vector.broadcast %cst_18 : f32 to vector<32x128xf32>
      %27 = arith.addf %26, %25 : vector<32x128xf32>
      %cst_19 = arith.constant 1.000000e+00 : f32
      %28 = vector.broadcast %cst_19 : f32 to vector<32x128xf32>
      %29 = arith.divf %28, %27 : vector<32x128xf32>
      %cst_20 = arith.constant 1.06140542 : f32
      %30 = vector.broadcast %cst_20 : f32 to vector<32x128xf32>
      %31 = arith.mulf %30, %29 : vector<32x128xf32>
      %cst_21 = arith.constant -1.45315206 : f32
      %32 = vector.broadcast %cst_21 : f32 to vector<32x128xf32>
      %33 = arith.addf %31, %32 : vector<32x128xf32>
      %34 = arith.mulf %33, %29 : vector<32x128xf32>
      %cst_22 = arith.constant 1.42141378 : f32
      %35 = vector.broadcast %cst_22 : f32 to vector<32x128xf32>
      %36 = arith.addf %34, %35 : vector<32x128xf32>
      %37 = arith.mulf %36, %29 : vector<32x128xf32>
      %cst_23 = arith.constant -0.284496725 : f32
      %38 = vector.broadcast %cst_23 : f32 to vector<32x128xf32>
      %39 = arith.addf %37, %38 : vector<32x128xf32>
      %40 = arith.mulf %39, %29 : vector<32x128xf32>
      %cst_24 = arith.constant 0.254829586 : f32
      %41 = vector.broadcast %cst_24 : f32 to vector<32x128xf32>
      %42 = arith.addf %40, %41 : vector<32x128xf32>
      %43 = arith.mulf %42, %29 : vector<32x128xf32>
      %cst_25 = arith.constant 0.000000e+00 : f32
      %44 = vector.broadcast %cst_25 : f32 to vector<32x128xf32>
      %45 = arith.subf %44, %23 : vector<32x128xf32>
      %46 = arith.mulf %45, %23 : vector<32x128xf32>
      %47 = math.exp %46 : vector<32x128xf32>
      %48 = arith.mulf %43, %47 : vector<32x128xf32>
      %cst_26 = arith.constant 1.000000e+00 : f32
      %49 = vector.broadcast %cst_26 : f32 to vector<32x128xf32>
      %50 = arith.subf %49, %48 : vector<32x128xf32>
      %cst_27 = arith.constant 0.000000e+00 : f32
      %51 = vector.broadcast %cst_27 : f32 to vector<32x128xf32>
      %52 = arith.cmpf oge, %22, %51 : vector<32x128xf32>
      %cst_28 = arith.constant 0.000000e+00 : f32
      %53 = vector.broadcast %cst_28 : f32 to vector<32x128xf32>
      %54 = arith.subf %53, %50 : vector<32x128xf32>
      %55 = arith.select %52, %50, %54 : vector<32x128xi1>, vector<32x128xf32>
      %cst_29 = arith.constant 1.000000e+00 : f32
      %56 = vector.broadcast %cst_29 : f32 to vector<32x128xf32>
      %57 = arith.addf %56, %55 : vector<32x128xf32>
      %58 = arith.mulf %20, %57 : vector<32x128xf32>
      %59 = arith.truncf %58 : vector<32x128xf32> to vector<32x128xbf16>
      %60 = arith.index_cast %arg11 : i32 to index
      %c0_30 = arith.constant 0 : index
      %c0_31 = arith.constant 0 : index
      %61 = vector.load %arg4[%60, %c0_30, %c0_31] : memref<2x32x160xbf16, #tpu.memory_space<vmem>>, vector<1x32x160xbf16>
      %62 = vector.shape_cast %61 : vector<1x32x160xbf16> to vector<32x160xbf16>
      %cst_32 = arith.constant 0.000000e+00 : bf16
      %63 = vector.broadcast %cst_32 : bf16 to vector<32x2xbf16>
      %64 = tpu.concatenate %63, %59, %63 in 1 : vector<32x2xbf16>, vector<32x128xbf16>, vector<32x2xbf16> -> vector<32x132xbf16>
      %65 = vector.extract_strided_slice %64 {offsets = [0, 0], sizes = [32, 128], strides = [1, 1]} : vector<32x132xbf16> to vector<32x128xbf16>
      %66 = vector.extract_strided_slice %64 {offsets = [0, 1], sizes = [32, 128], strides = [1, 1]} : vector<32x132xbf16> to vector<32x128xbf16>
      %67 = vector.extract_strided_slice %64 {offsets = [0, 3], sizes = [32, 128], strides = [1, 1]} : vector<32x132xbf16> to vector<32x128xbf16>
      %68 = vector.extract_strided_slice %64 {offsets = [0, 4], sizes = [32, 128], strides = [1, 1]} : vector<32x132xbf16> to vector<32x128xbf16>
      %69 = tpu.concatenate %65, %66, %59, %67, %68 in 0 : vector<32x128xbf16>, vector<32x128xbf16>, vector<32x128xbf16>, vector<32x128xbf16>, vector<32x128xbf16> -> vector<160x128xbf16>
      %cst_33 = arith.constant dense<0.000000e+00> : vector<32x128xf32>
      %70 = tpu.matmul %62, %69, %cst_33 {dimension_numbers = #tpu.dot_dimension_numbers<[1], [0], [0], [1], [0, 0, 1, 1], [], []>} : vector<32x160xbf16>, vector<160x128xbf16>, vector<32x128xf32> -> vector<32x128xf32>
      %71 = arith.index_cast %arg11 : i32 to index
      %c0_34 = arith.constant 0 : index
      %c0_35 = arith.constant 0 : index
      %72 = vector.load %arg5[%71, %c0_34, %c0_35] : memref<2x32x1xf32, #tpu.memory_space<vmem>>, vector<1x32x1xf32>
      %73 = vector.shape_cast %72 : vector<1x32x1xf32> to vector<32x1xf32>
      %74 = vector.broadcast %73 : vector<32x1xf32> to vector<32x128xf32>
      %75 = arith.addf %70, %74 : vector<32x128xf32>
      %cst_36 = arith.constant 5.000000e-01 : f32
      %76 = vector.broadcast %cst_36 : f32 to vector<32x128xf32>
      %77 = arith.mulf %76, %75 : vector<32x128xf32>
      %cst_37 = arith.constant 0.707106769 : f32
      %78 = vector.broadcast %cst_37 : f32 to vector<32x128xf32>
      %79 = arith.mulf %75, %78 : vector<32x128xf32>
      %80 = math.absf %79 : vector<32x128xf32>
      %cst_38 = arith.constant 0.327591091 : f32
      %81 = vector.broadcast %cst_38 : f32 to vector<32x128xf32>
      %82 = arith.mulf %81, %80 : vector<32x128xf32>
      %cst_39 = arith.constant 1.000000e+00 : f32
      %83 = vector.broadcast %cst_39 : f32 to vector<32x128xf32>
      %84 = arith.addf %83, %82 : vector<32x128xf32>
      %cst_40 = arith.constant 1.000000e+00 : f32
      %85 = vector.broadcast %cst_40 : f32 to vector<32x128xf32>
      %86 = arith.divf %85, %84 : vector<32x128xf32>
      %cst_41 = arith.constant 1.06140542 : f32
      %87 = vector.broadcast %cst_41 : f32 to vector<32x128xf32>
      %88 = arith.mulf %87, %86 : vector<32x128xf32>
      %cst_42 = arith.constant -1.45315206 : f32
      %89 = vector.broadcast %cst_42 : f32 to vector<32x128xf32>
      %90 = arith.addf %88, %89 : vector<32x128xf32>
      %91 = arith.mulf %90, %86 : vector<32x128xf32>
      %cst_43 = arith.constant 1.42141378 : f32
      %92 = vector.broadcast %cst_43 : f32 to vector<32x128xf32>
      %93 = arith.addf %91, %92 : vector<32x128xf32>
      %94 = arith.mulf %93, %86 : vector<32x128xf32>
      %cst_44 = arith.constant -0.284496725 : f32
      %95 = vector.broadcast %cst_44 : f32 to vector<32x128xf32>
      %96 = arith.addf %94, %95 : vector<32x128xf32>
      %97 = arith.mulf %96, %86 : vector<32x128xf32>
      %cst_45 = arith.constant 0.254829586 : f32
      %98 = vector.broadcast %cst_45 : f32 to vector<32x128xf32>
      %99 = arith.addf %97, %98 : vector<32x128xf32>
      %100 = arith.mulf %99, %86 : vector<32x128xf32>
      %cst_46 = arith.constant 0.000000e+00 : f32
      %101 = vector.broadcast %cst_46 : f32 to vector<32x128xf32>
      %102 = arith.subf %101, %80 : vector<32x128xf32>
      %103 = arith.mulf %102, %80 : vector<32x128xf32>
      %104 = math.exp %103 : vector<32x128xf32>
      %105 = arith.mulf %100, %104 : vector<32x128xf32>
      %cst_47 = arith.constant 1.000000e+00 : f32
      %106 = vector.broadcast %cst_47 : f32 to vector<32x128xf32>
      %107 = arith.subf %106, %105 : vector<32x128xf32>
      %cst_48 = arith.constant 0.000000e+00 : f32
      %108 = vector.broadcast %cst_48 : f32 to vector<32x128xf32>
      %109 = arith.cmpf oge, %79, %108 : vector<32x128xf32>
      %cst_49 = arith.constant 0.000000e+00 : f32
      %110 = vector.broadcast %cst_49 : f32 to vector<32x128xf32>
      %111 = arith.subf %110, %107 : vector<32x128xf32>
      %112 = arith.select %109, %107, %111 : vector<32x128xi1>, vector<32x128xf32>
      %cst_50 = arith.constant 1.000000e+00 : f32
      %113 = vector.broadcast %cst_50 : f32 to vector<32x128xf32>
      %114 = arith.addf %113, %112 : vector<32x128xf32>
      %115 = arith.mulf %77, %114 : vector<32x128xf32>
      %116 = arith.truncf %115 : vector<32x128xf32> to vector<32x128xbf16>
      %117 = arith.index_cast %arg11 : i32 to index
      %c0_51 = arith.constant 0 : index
      %c0_52 = arith.constant 0 : index
      %118 = vector.load %arg6[%117, %c0_51, %c0_52] : memref<2x32x160xbf16, #tpu.memory_space<vmem>>, vector<1x32x160xbf16>
      %119 = vector.shape_cast %118 : vector<1x32x160xbf16> to vector<32x160xbf16>
      %cst_53 = arith.constant 0.000000e+00 : bf16
      %120 = vector.broadcast %cst_53 : bf16 to vector<32x2xbf16>
      %121 = tpu.concatenate %120, %116, %120 in 1 : vector<32x2xbf16>, vector<32x128xbf16>, vector<32x2xbf16> -> vector<32x132xbf16>
      %122 = vector.extract_strided_slice %121 {offsets = [0, 0], sizes = [32, 128], strides = [1, 1]} : vector<32x132xbf16> to vector<32x128xbf16>
      %123 = vector.extract_strided_slice %121 {offsets = [0, 1], sizes = [32, 128], strides = [1, 1]} : vector<32x132xbf16> to vector<32x128xbf16>
      %124 = vector.extract_strided_slice %121 {offsets = [0, 3], sizes = [32, 128], strides = [1, 1]} : vector<32x132xbf16> to vector<32x128xbf16>
      %125 = vector.extract_strided_slice %121 {offsets = [0, 4], sizes = [32, 128], strides = [1, 1]} : vector<32x132xbf16> to vector<32x128xbf16>
      %126 = tpu.concatenate %122, %123, %116, %124, %125 in 0 : vector<32x128xbf16>, vector<32x128xbf16>, vector<32x128xbf16>, vector<32x128xbf16>, vector<32x128xbf16> -> vector<160x128xbf16>
      %cst_54 = arith.constant dense<0.000000e+00> : vector<32x128xf32>
      %127 = tpu.matmul %119, %126, %cst_54 {dimension_numbers = #tpu.dot_dimension_numbers<[1], [0], [0], [1], [0, 0, 1, 1], [], []>} : vector<32x160xbf16>, vector<160x128xbf16>, vector<32x128xf32> -> vector<32x128xf32>
      %128 = arith.index_cast %arg11 : i32 to index
      %c0_55 = arith.constant 0 : index
      %c0_56 = arith.constant 0 : index
      %129 = vector.load %arg7[%128, %c0_55, %c0_56] : memref<2x32x1xf32, #tpu.memory_space<vmem>>, vector<1x32x1xf32>
      %130 = vector.shape_cast %129 : vector<1x32x1xf32> to vector<32x1xf32>
      %131 = vector.broadcast %130 : vector<32x1xf32> to vector<32x128xf32>
      %132 = arith.addf %127, %131 : vector<32x128xf32>
      %133 = arith.addf %132, %arg12 : vector<32x128xf32>
      scf.yield %133 : vector<32x128xf32>
    }
    %c2_i32_6 = arith.constant 2 : i32
    %c0_7 = arith.constant 0 : index
    %c0_8 = arith.constant 0 : index
    %10 = vector.load %arg8[%c0_7, %c0_8] : memref<4x32xbf16, #tpu.memory_space<vmem>>, vector<4x32xbf16>
    %11 = arith.truncf %9 : vector<32x128xf32> to vector<32x128xbf16>
    %cst_9 = arith.constant dense<0.000000e+00> : vector<4x128xf32>
    %12 = tpu.matmul %10, %11, %cst_9 {dimension_numbers = #tpu.dot_dimension_numbers<[1], [0], [0], [1], [0, 0, 1, 1], [], []>} : vector<4x32xbf16>, vector<32x128xbf16>, vector<4x128xf32> -> vector<4x128xf32>
    %c0_10 = arith.constant 0 : index
    %c0_11 = arith.constant 0 : index
    %13 = vector.load %arg9[%c0_10, %c0_11] : memref<4x1xf32, #tpu.memory_space<vmem>>, vector<4x1xf32>
    %14 = vector.broadcast %13 : vector<4x1xf32> to vector<4x128xf32>
    %15 = arith.addf %12, %14 : vector<4x128xf32>
    %c0_12 = arith.constant 0 : index
    %c0_13 = arith.constant 0 : index
    %c0_14 = arith.constant 0 : index
    %16 = vector.load %arg10[%c0_12, %c0_13, %c0_14] : memref<1x4x128xf32, #tpu.memory_space<vmem>>, vector<1x4x128xf32>
    %17 = vector.shape_cast %16 : vector<1x4x128xf32> to vector<4x128xf32>
    %18 = vector.shape_cast %15 : vector<4x128xf32> to vector<1x4x128xf32>
    tpu.vector_store %arg10[%c0_12, %c0_13, %c0_14], %18 {strides = array<i32>} : memref<1x4x128xf32, #tpu.memory_space<vmem>>, vector<1x4x128xf32>,
    return
  }
  func.func @transform_0(%arg0: i32) -> (i32, i32, i32) {
    %c0_i32 = arith.constant 0 : i32
    %c0_i32_0 = arith.constant 0 : i32
    %c0_i32_1 = arith.constant 0 : i32
    return %arg0, %c0_i32, %c0_i32_0 : i32, i32, i32
  }
  func.func @transform_1(%arg0: i32) -> (i32, i32) {
    %c0_i32 = arith.constant 0 : i32
    %c0_i32_0 = arith.constant 0 : i32
    %c0_i32_1 = arith.constant 0 : i32
    return %c0_i32, %c0_i32_0 : i32, i32
  }
  func.func @transform_2(%arg0: i32) -> (i32, i32) {
    %c0_i32 = arith.constant 0 : i32
    %c0_i32_0 = arith.constant 0 : i32
    %c0_i32_1 = arith.constant 0 : i32
    return %c0_i32, %c0_i32_0 : i32, i32
  }
  func.func @transform_3(%arg0: i32) -> (i32, i32, i32) {
    %c0_i32 = arith.constant 0 : i32
    %c0_i32_0 = arith.constant 0 : i32
    %c0_i32_1 = arith.constant 0 : i32
    %c0_i32_2 = arith.constant 0 : i32
    return %c0_i32, %c0_i32_0, %c0_i32_1 : i32, i32, i32
  }
  func.func @transform_4(%arg0: i32) -> (i32, i32, i32) {
    %c0_i32 = arith.constant 0 : i32
    %c0_i32_0 = arith.constant 0 : i32
    %c0_i32_1 = arith.constant 0 : i32
    %c0_i32_2 = arith.constant 0 : i32
    return %c0_i32, %c0_i32_0, %c0_i32_1 : i32, i32, i32
  }
  func.func @transform_5(%arg0: i32) -> (i32, i32, i32) {
    %c0_i32 = arith.constant 0 : i32
    %c0_i32_0 = arith.constant 0 : i32
    %c0_i32_1 = arith.constant 0 : i32
    %c0_i32_2 = arith.constant 0 : i32
    return %c0_i32, %c0_i32_0, %c0_i32_1 : i32, i32, i32
  }
  func.func @transform_6(%arg0: i32) -> (i32, i32, i32) {
    %c0_i32 = arith.constant 0 : i32
    %c0_i32_0 = arith.constant 0 : i32
    %c0_i32_1 = arith.constant 0 : i32
    %c0_i32_2 = arith.constant 0 : i32
    return %c0_i32, %c0_i32_0, %c0_i32_1 : i32, i32, i32
  }
  func.func @transform_7(%arg0: i32) -> (i32, i32) {
    %c0_i32 = arith.constant 0 : i32
    %c0_i32_0 = arith.constant 0 : i32
    %c0_i32_1 = arith.constant 0 : i32
    return %c0_i32, %c0_i32_0 : i32, i32
  }
  func.func @transform_8(%arg0: i32) -> (i32, i32) {
    %c0_i32 = arith.constant 0 : i32
    %c0_i32_0 = arith.constant 0 : i32
    %c0_i32_1 = arith.constant 0 : i32
    return %c0_i32, %c0_i32_0 : i32, i32
  }
  func.func @transform_9(%arg0: i32) -> (i32, i32, i32) {
    %c0_i32 = arith.constant 0 : i32
    %c0_i32_0 = arith.constant 0 : i32
    %c0_i32_1 = arith.constant 0 : i32
    return %arg0, %c0_i32, %c0_i32_0 : i32, i32, i32
  }
}

</mosaic_0001>

<llo_original>
// kernel: tpu_custom_call.1
$region0: #{tpu_custom_call.1}
  #allocation0 [shape = 'u32[]', space=smem, size = 0x4, offset = 0x4, fixed_abs, tag = 'smem constant byte address 0x4 - core index']
  #allocation1 [shape = 'u32[144,128]{1,0:T(1,128)}', space=vmem, size = 0x12000, scoped, tag = 'internal scratch']
  %s0 = inlined_call_operand.hbm [shape: f32[2,16,128], index: 0, kind: input, shape index: {}]
  %s1 = inlined_call_operand.hbm [shape: bf16[32,16], index: 1, kind: input, shape index: {}]
  %s2 = inlined_call_operand.hbm [shape: f32[32,1], index: 2, kind: input, shape index: {}]
  %s3 = inlined_call_operand.hbm [shape: bf16[2,32,160], index: 3, kind: input, shape index: {}]
  %s4 = inlined_call_operand.hbm [shape: f32[2,32,1], index: 4, kind: input, shape index: {}]
  %s5 = inlined_call_operand.hbm [shape: bf16[2,32,160], index: 5, kind: input, shape index: {}]
  %s6 = inlined_call_operand.hbm [shape: f32[2,32,1], index: 6, kind: input, shape index: {}]
  %s7 = inlined_call_operand.hbm [shape: bf16[4,32], index: 7, kind: input, shape index: {}]
  %s8 = inlined_call_operand.hbm [shape: f32[4,1], index: 8, kind: input, shape index: {}]
  %s9 = inlined_call_operand.hbm [shape: f32[2,4,128], index: 9, kind: output, shape index: {}]
  %s10 = sld [smem:[#allocation0]]
  $region112: #{tpu_custom_call.1} parent=0
    _
  %s12 = ssub.s32 1, %s10
  %s13 = scalar_select 0, %s12, %s10
  $region1: #{tpu_custom_call.1} parent=0
    #allocation2 [shape = 'u8[16384]{0}', space=vmem, size = 0x4000, scoped, tag = 'input window, operand 0']
    #allocation3 [shape = 's32[2]{0}', space=sflag, size = 0x8, scoped, tag = 'scoped memory for tpu_custom_call.1']
    #allocation4 [shape = 's32[2]{0}', space=sflag, size = 0x8, scoped, tag = 'scoped memory for tpu_custom_call.1']
    #allocation5 [shape = 'u8[8192]{0}', space=vmem, size = 0x2000, scoped, tag = 'input window, operand 1, single buffered']
    #allocation6 [shape = 's32[1]{0}', space=sflag, size = 0x4, scoped, tag = 'scoped memory for tpu_custom_call.1']
    #allocation7 [shape = 'u8[16384]{0}', space=vmem, size = 0x4000, scoped, tag = 'input window, operand 2, single buffered']
    #allocation8 [shape = 'u8[32768]{0}', space=vmem, size = 0x8000, scoped, tag = 'input window, operand 3, single buffered']
    #allocation9 [shape = 's32[1]{0}', space=sflag, size = 0x4, scoped, tag = 'scoped memory for tpu_custom_call.1']
    #allocation10 [shape = 'u8[32768]{0}', space=vmem, size = 0x8000, scoped, tag = 'input window, operand 4, single buffered']
    #allocation11 [shape = 'u8[32768]{0}', space=vmem, size = 0x8000, scoped, tag = 'input window, operand 5, single buffered']
    #allocation12 [shape = 's32[1]{0}', space=sflag, size = 0x4, scoped, tag = 'scoped memory for tpu_custom_call.1']
    #allocation13 [shape = 'u8[32768]{0}', space=vmem, size = 0x8000, scoped, tag = 'input window, operand 6, single buffered']
    #allocation14 [shape = 'u8[1024]{0}', space=vmem, size = 0x400, scoped, tag = 'input window, operand 7, single buffered']
    #allocation15 [shape = 's32[1]{0}', space=sflag, size = 0x4, scoped, tag = 'scoped memory for tpu_custom_call.1']
    #allocation16 [shape = 'u8[2048]{0}', space=vmem, size = 0x800, scoped, tag = 'input window, operand 8, single buffered']
    #allocation17 [shape = 'u8[4096]{0}', space=vmem, size = 0x1000, scoped, tag = 'output window, operand 0']
    %14 = vsyncpa [#allocation3], 0
    %s15 = scalar_lea.sflag [#allocation3], 1
    %16 = vsyncpa %s15, 0
    %17 = vsyncpa [#allocation6], 0
    %18 = vsyncpa [#allocation9], 0
    %19 = vsyncpa [#allocation12], 0
    %20 = vsyncpa [#allocation15], 0
    %21 = vsyncpa [#allocation4], 0
    %s22 = scalar_lea.sflag [#allocation4], 1
    %23 = vsyncpa %s22, 0
    loop: start=0, step=1, limit=4
    $region2: #{tpu_custom_call.1} parent=1 // loop_pre_header
      _
    $region3: #{tpu_custom_call.1} parent=1 // loop_header
      %s25 = sphi 0, %s29
      %p26 = scmp.ge.s32.totalorder %s25, 4
      %s35 = sphi 0, %s37
      %s38 = sphi 0, %s35
      %s39 = sphi 0, %s38
      %s55 = sphi 0, %s39
      %s59 = sphi 0, %s59
      %s61 = sphi 0, %s59
      %s62 = sphi 0, %s61
      %s76 = sphi 0, %s62
      %s80 = sphi 0, %s80
      %s82 = sphi 0, %s80
      %s83 = sphi 0, %s82
      %s97 = sphi 0, %s83
      %s101 = sphi 0, %s101
      %s103 = sphi 0, %s101
      %s104 = sphi 0, %s103
      %s118 = sphi 0, %s104
      %s122 = sphi 0, %s122
      %s124 = sphi 0, %s122
      %s125 = sphi 0, %s124
      %s139 = sphi 0, %s125
      %s143 = sphi 0, %s143
      %s145 = sphi 0, %s143
      %s146 = sphi 0, %s145
      %s160 = sphi 0, %s146
      %s164 = sphi 0, %s164
      %s166 = sphi 0, %s164
      %s167 = sphi 0, %s166
      %s181 = sphi 0, %s167
      %s185 = sphi 0, %s185
      %s187 = sphi 0, %s185
      %s188 = sphi 0, %s187
      %s202 = sphi 0, %s188
      %s206 = sphi 0, %s206
      %s208 = sphi 0, %s206
      %s209 = sphi 0, %s208
      %s223 = sphi 0, %s209
      %s229 = sphi 0, %s231
      %s232 = sphi 0, %s229
      %s233 = sphi 0, %s232
      %s249 = sphi 0, %s233
    $region4: #{tpu_custom_call.1} parent=1 // loop_header_branch
      %28 = sbr.rel (%p26) target = $region8
    $region5: #{tpu_custom_call.1} parent=1 // loop_body
      %s30 = ssub.s32 %s25, 1
      %s31 = ssub.s32 %s25, 2
      %s32 = sadd.s32 %s25, 1
      %s33 = ssub.s32 %s25, %s32
      %p34 = scmp.eq.s32.totalorder %s33, 0
      %s36 = sadd.s32 %s35, 1
      %s37 = scalar_select %p34, %s35, %s36
      %p40 = pneg %p34
      %p41 = scmp.eq.s32.totalorder %s25, 1
      %p42 = por %p40, %p41
      %p43 = scmp.ne.s32.totalorder %s35, %s38
      %p44 = scmp.eq.s32.totalorder %s25, 0
      %p45 = por %p43, %p44
      %p46 = scmp.ne.s32.totalorder %s35, %s38
      %p47 = scmp.eq.s32.totalorder %s30, 1
      %p48 = por %p46, %p47
      %p49 = scmp.ne.s32.totalorder %s38, %s39
      %p50 = scmp.eq.s32.totalorder %s30, 0
      %p51 = por %p49, %p50
      %p52 = scmp.ne.s32.totalorder %s38, %s39
      %p53 = scmp.eq.s32.totalorder %s31, 1
      %p54 = por %p52, %p53
      %p56 = scmp.ne.s32.totalorder %s39, %s55
      %p57 = scmp.eq.s32.totalorder %s31, 0
      %p58 = por %p56, %p57
      %s60 = sadd.s32 %s59, 1
      %p63 = scmp.eq.s32.totalorder %s25, 1
      %p64 = scmp.ne.s32.totalorder %s59, %s61
      %p65 = scmp.eq.s32.totalorder %s25, 0
      %p66 = por %p64, %p65
      %p67 = scmp.ne.s32.totalorder %s59, %s61
      %p68 = scmp.eq.s32.totalorder %s30, 1
      %p69 = por %p67, %p68
      %p70 = scmp.ne.s32.totalorder %s61, %s62
      %p71 = scmp.eq.s32.totalorder %s30, 0
      %p72 = por %p70, %p71
      %p73 = scmp.ne.s32.totalorder %s61, %s62
      %p74 = scmp.eq.s32.totalorder %s31, 1
      %p75 = por %p73, %p74
      %p77 = scmp.ne.s32.totalorder %s62, %s76
      %p78 = scmp.eq.s32.totalorder %s31, 0
      %p79 = por %p77, %p78
      %s81 = sadd.s32 %s80, 1
      %p84 = scmp.eq.s32.totalorder %s25, 1
      %p85 = scmp.ne.s32.totalorder %s80, %s82
      %p86 = scmp.eq.s32.totalorder %s25, 0
      %p87 = por %p85, %p86
      %p88 = scmp.ne.s32.totalorder %s80, %s82
      %p89 = scmp.eq.s32.totalorder %s30, 1
      %p90 = por %p88, %p89
      %p91 = scmp.ne.s32.totalorder %s82, %s83
      %p92 = scmp.eq.s32.totalorder %s30, 0
      %p93 = por %p91, %p92
      %p94 = scmp.ne.s32.totalorder %s82, %s83
      %p95 = scmp.eq.s32.totalorder %s31, 1
      %p96 = por %p94, %p95
      %p98 = scmp.ne.s32.totalorder %s83, %s97
      %p99 = scmp.eq.s32.totalorder %s31, 0
      %p100 = por %p98, %p99
      %s102 = sadd.s32 %s101, 1
      %p105 = scmp.eq.s32.totalorder %s25, 1
      %p106 = scmp.ne.s32.totalorder %s101, %s103
      %p107 = scmp.eq.s32.totalorder %s25, 0
      %p108 = por %p106, %p107
      %p109 = scmp.ne.s32.totalorder %s101, %s103
      %p110 = scmp.eq.s32.totalorder %s30, 1
      %p111 = por %p109, %p110
      %p112 = scmp.ne.s32.totalorder %s103, %s104
      %p113 = scmp.eq.s32.totalorder %s30, 0
      %p114 = por %p112, %p113
      %p115 = scmp.ne.s32.totalorder %s103, %s104
      %p116 = scmp.eq.s32.totalorder %s31, 1
      %p117 = por %p115, %p116
      %p119 = scmp.ne.s32.totalorder %s104, %s118
      %p120 = scmp.eq.s32.totalorder %s31, 0
      %p121 = por %p119, %p120
      %s123 = sadd.s32 %s122, 1
      %p126 = scmp.eq.s32.totalorder %s25, 1
      %p127 = scmp.ne.s32.totalorder %s122, %s124
      %p128 = scmp.eq.s32.totalorder %s25, 0
      %p129 = por %p127, %p128
      %p130 = scmp.ne.s32.totalorder %s122, %s124
      %p131 = scmp.eq.s32.totalorder %s30, 1
      %p132 = por %p130, %p131
      %p133 = scmp.ne.s32.totalorder %s124, %s125
      %p134 = scmp.eq.s32.totalorder %s30, 0
      %p135 = por %p133, %p134
      %p136 = scmp.ne.s32.totalorder %s124, %s125
      %p137 = scmp.eq.s32.totalorder %s31, 1
      %p138 = por %p136, %p137
      %p140 = scmp.ne.s32.totalorder %s125, %s139
      %p141 = scmp.eq.s32.totalorder %s31, 0
      %p142 = por %p140, %p141
      %s144 = sadd.s32 %s143, 1
      %p147 = scmp.eq.s32.totalorder %s25, 1
      %p148 = scmp.ne.s32.totalorder %s143, %s145
      %p149 = scmp.eq.s32.totalorder %s25, 0
      %p150 = por %p148, %p149
      %p151 = scmp.ne.s32.totalorder %s143, %s145
      %p152 = scmp.eq.s32.totalorder %s30, 1
      %p153 = por %p151, %p152
      %p154 = scmp.ne.s32.totalorder %s145, %s146
      %p155 = scmp.eq.s32.totalorder %s30, 0
      %p156 = por %p154, %p155
      %p157 = scmp.ne.s32.totalorder %s145, %s146
      %p158 = scmp.eq.s32.totalorder %s31, 1
      %p159 = por %p157, %p158
      %p161 = scmp.ne.s32.totalorder %s146, %s160
      %p162 = scmp.eq.s32.totalorder %s31, 0
      %p163 = por %p161, %p162
      %s165 = sadd.s32 %s164, 1
      %p168 = scmp.eq.s32.totalorder %s25, 1
      %p169 = scmp.ne.s32.totalorder %s164, %s166
      %p170 = scmp.eq.s32.totalorder %s25, 0
      %p171 = por %p169, %p170
      %p172 = scmp.ne.s32.totalorder %s164, %s166
      %p173 = scmp.eq.s32.totalorder %s30, 1
      %p174 = por %p172, %p173
      %p175 = scmp.ne.s32.totalorder %s166, %s167
      %p176 = scmp.eq.s32.totalorder %s30, 0
      %p177 = por %p175, %p176
      %p178 = scmp.ne.s32.totalorder %s166, %s167
      %p179 = scmp.eq.s32.totalorder %s31, 1
      %p180 = por %p178, %p179
      %p182 = scmp.ne.s32.totalorder %s167, %s181
      %p183 = scmp.eq.s32.totalorder %s31, 0
      %p184 = por %p182, %p183
      %s186 = sadd.s32 %s185, 1
      %p189 = scmp.eq.s32.totalorder %s25, 1
      %p190 = scmp.ne.s32.totalorder %s185, %s187
      %p191 = scmp.eq.s32.totalorder %s25, 0
      %p192 = por %p190, %p191
      %p193 = scmp.ne.s32.totalorder %s185, %s187
      %p194 = scmp.eq.s32.totalorder %s30, 1
      %p195 = por %p193, %p194
      %p196 = scmp.ne.s32.totalorder %s187, %s188
      %p197 = scmp.eq.s32.totalorder %s30, 0
      %p198 = por %p196, %p197
      %p199 = scmp.ne.s32.totalorder %s187, %s188
      %p200 = scmp.eq.s32.totalorder %s31, 1
      %p201 = por %p199, %p200
      %p203 = scmp.ne.s32.totalorder %s188, %s202
      %p204 = scmp.eq.s32.totalorder %s31, 0
      %p205 = por %p203, %p204
      %s207 = sadd.s32 %s206, 1
      %p210 = scmp.eq.s32.totalorder %s25, 1
      %p211 = scmp.ne.s32.totalorder %s206, %s208
      %p212 = scmp.eq.s32.totalorder %s25, 0
      %p213 = por %p211, %p212
      %p214 = scmp.ne.s32.totalorder %s206, %s208
      %p215 = scmp.eq.s32.totalorder %s30, 1
      %p216 = por %p214, %p215
      %p217 = scmp.ne.s32.totalorder %s208, %s209
      %p218 = scmp.eq.s32.totalorder %s30, 0
      %p219 = por %p217, %p218
      %p220 = scmp.ne.s32.totalorder %s208, %s209
      %p221 = scmp.eq.s32.totalorder %s31, 1
      %p222 = por %p220, %p221
      %p224 = scmp.ne.s32.totalorder %s209, %s223
      %p225 = scmp.eq.s32.totalorder %s31, 0
      %p226 = por %p224, %p225
      %s227 = ssub.s32 %s25, %s32
      %p228 = scmp.eq.s32.totalorder %s227, 0
      %s230 = sadd.s32 %s229, 1
      %s231 = scalar_select %p228, %s229, %s230
      %p234 = pneg %p228
      %p235 = scmp.eq.s32.totalorder %s25, 1
      %p236 = por %p234, %p235
      %p237 = scmp.ne.s32.totalorder %s229, %s232
      %p238 = scmp.eq.s32.totalorder %s25, 0
      %p239 = por %p237, %p238
      %p240 = scmp.ne.s32.totalorder %s229, %s232
      %p241 = scmp.eq.s32.totalorder %s30, 1
      %p242 = por %p240, %p241
      %p243 = scmp.ne.s32.totalorder %s232, %s233
      %p244 = scmp.eq.s32.totalorder %s30, 0
      %p245 = por %p243, %p244
      %p246 = scmp.ne.s32.totalorder %s232, %s233
      %p247 = scmp.eq.s32.totalorder %s31, 1
      %p248 = por %p246, %p247
      %p250 = scmp.ne.s32.totalorder %s233, %s249
      %p251 = scmp.eq.s32.totalorder %s31, 0
      %p252 = por %p250, %p251
      %p253 = scmp.le.s32.totalorder 1, %s25
      %p254 = scmp.lt.s32.totalorder %s25, 3
      %p255 = pnand %p253, %p254
      %p256 = pneg %p255
      // Predicated region
      $region9: #{tpu_custom_call.1} parent=5 // pred_check
        _
      $region10: #{tpu_custom_call.1} parent=5 // pred_check_branch
        %258 = sbr.rel (%p255) target = $region12
      $region11: #{tpu_custom_call.1} parent=5 // pred_region
        %s259 = ssub.s32 %s25, 1
        // Predicated region
        $region13: #{tpu_custom_call.1} parent=11 // pred_check
          %p260 = pneg %p72
        $region14: #{tpu_custom_call.1} parent=11 // pred_check_branch
          %262 = sbr.rel (%p260) target = $region16
        $region15: #{tpu_custom_call.1} parent=11 // pred_region
          %s264 = ssub.s32 256, 256
          %265 = vsyncadd [#allocation6], %s264
          %s266 = sshll.u32 [#allocation5], 4
          %s267 = int_to_ptr.vmem [resolvable:$true] %s266
          %272 = dma.hbm_to_vmem [thread:$0]  %s1, 256, %s267, [#allocation6], 64, 64, 4
        $region16: #{tpu_custom_call.1} parent=11 // pred_fallthru
          _
        // Predicated region
        $region17: #{tpu_custom_call.1} parent=11 // pred_check
          %p273 = pneg %p93
        $region18: #{tpu_custom_call.1} parent=11 // pred_check_branch
          %275 = sbr.rel (%p273) target = $region20
        $region19: #{tpu_custom_call.1} parent=11 // pred_region
          %s277 = ssub.s32 512, 512
          %278 = vsyncadd [#allocation6], %s277
          %s279 = sshll.u32 [#allocation7], 4
          %s280 = int_to_ptr.vmem [resolvable:$true] %s279
          %285 = dma.hbm_to_vmem [thread:$0]  %s2, 512, %s280, [#allocation6], 128, 128, 8
        $region20: #{tpu_custom_call.1} parent=11 // pred_fallthru
          _
        // Predicated region
        $region21: #{tpu_custom_call.1} parent=11 // pred_check
          %p286 = pneg %p114
        $region22: #{tpu_custom_call.1} parent=11 // pred_check_branch
          %288 = sbr.rel (%p286) target = $region24
        $region23: #{tpu_custom_call.1} parent=11 // pred_region
          %s290 = ssub.s32 1024, 1024
          %291 = vsyncadd [#allocation9], %s290
          %s292 = sshll.u32 [#allocation8], 4
          %s293 = int_to_ptr.vmem [resolvable:$true] %s292
          %298 = dma.hbm_to_vmem [thread:$0]  %s3, 1024, %s293, [#allocation9], 128, 128, 8
        $region24: #{tpu_custom_call.1} parent=11 // pred_fallthru
          _
        // Predicated region
        $region25: #{tpu_custom_call.1} parent=11 // pred_check
          %p299 = pneg %p135
        $region26: #{tpu_custom_call.1} parent=11 // pred_check_branch
          %301 = sbr.rel (%p299) target = $region28
        $region27: #{tpu_custom_call.1} parent=11 // pred_region
          %s303 = ssub.s32 1024, 1024
          %304 = vsyncadd [#allocation9], %s303
          %s305 = sshll.u32 [#allocation10], 4
          %s306 = int_to_ptr.vmem [resolvable:$true] %s305
          %311 = dma.hbm_to_vmem [thread:$0]  %s4, 1024, %s306, [#allocation9], 128, 128, 8
        $region28: #{tpu_custom_call.1} parent=11 // pred_fallthru
          _
        // Predicated region
        $region29: #{tpu_custom_call.1} parent=11 // pred_check
          %p312 = pneg %p156
        $region30: #{tpu_custom_call.1} parent=11 // pred_check_branch
          %314 = sbr.rel (%p312) target = $region32
        $region31: #{tpu_custom_call.1} parent=11 // pred_region
          %s316 = ssub.s32 1024, 1024
          %317 = vsyncadd [#allocation12], %s316
          %s318 = sshll.u32 [#allocation11], 4
          %s319 = int_to_ptr.vmem [resolvable:$true] %s318
          %324 = dma.hbm_to_vmem [thread:$0]  %s5, 1024, %s319, [#allocation12], 128, 128, 8
        $region32: #{tpu_custom_call.1} parent=11 // pred_fallthru
          _
        // Predicated region
        $region33: #{tpu_custom_call.1} parent=11 // pred_check
          %p325 = pneg %p177
        $region34: #{tpu_custom_call.1} parent=11 // pred_check_branch
          %327 = sbr.rel (%p325) target = $region36
        $region35: #{tpu_custom_call.1} parent=11 // pred_region
          %s329 = ssub.s32 1024, 1024
          %330 = vsyncadd [#allocation12], %s329
          %s331 = sshll.u32 [#allocation13], 4
          %s332 = int_to_ptr.vmem [resolvable:$true] %s331
          %337 = dma.hbm_to_vmem [thread:$0]  %s6, 1024, %s332, [#allocation12], 128, 128, 8
        $region36: #{tpu_custom_call.1} parent=11 // pred_fallthru
          _
        // Predicated region
        $region37: #{tpu_custom_call.1} parent=11 // pred_check
          %p338 = pneg %p198
        $region38: #{tpu_custom_call.1} parent=11 // pred_check_branch
          %340 = sbr.rel (%p338) target = $region40
        $region39: #{tpu_custom_call.1} parent=11 // pred_region
          %s342 = ssub.s32 32, 32
          %343 = vsyncadd [#allocation15], %s342
          %s345 = sshll.u32 [#allocation14], 4
          %s346 = int_to_ptr.vmem [resolvable:$true] %s345
          %348 = dma.hbm_to_vmem [thread:$0]  %s7, 32, %s346, [#allocation15]
        $region40: #{tpu_custom_call.1} parent=11 // pred_fallthru
          _
        // Predicated region
        $region41: #{tpu_custom_call.1} parent=11 // pred_check
          %p349 = pneg %p219
        $region42: #{tpu_custom_call.1} parent=11 // pred_check_branch
          %351 = sbr.rel (%p349) target = $region44
        $region43: #{tpu_custom_call.1} parent=11 // pred_region
          %s353 = ssub.s32 64, 64
          %354 = vsyncadd [#allocation15], %s353
          %s356 = sshll.u32 [#allocation16], 4
          %s357 = int_to_ptr.vmem [resolvable:$true] %s356
          %359 = dma.hbm_to_vmem [thread:$0]  %s8, 64, %s357, [#allocation15]
        $region44: #{tpu_custom_call.1} parent=11 // pred_fallthru
          _
      $region12: #{tpu_custom_call.1} parent=5 // pred_fallthru
        _
      %p360 = scmp.lt.s32.totalorder %s25, 2
      // Predicated region
      $region45: #{tpu_custom_call.1} parent=5 // pred_check
        %p361 = pneg %p360
      $region46: #{tpu_custom_call.1} parent=5 // pred_check_branch
        %363 = sbr.rel (%p361) target = $region48
      $region47: #{tpu_custom_call.1} parent=5 // pred_region
        // Predicated region
        $region49: #{tpu_custom_call.1} parent=47 // pred_check
          %p364 = pneg %p45
        $region50: #{tpu_custom_call.1} parent=47 // pred_check_branch
          %366 = sbr.rel (%p364) target = $region52
        $region51: #{tpu_custom_call.1} parent=47 // pred_region
          %s367 = sand.u32 %s35, 1
          %s368 = scalar_lea.sflag [#allocation3], %s367
          %s369 = sand.u32 %s35, 1
          %s370 = smul.addr %s369, 16
          %s371 = scalar_lea.vmem [#allocation2], %s370
          %s373 = ssub.s32 256, 256
          %374 = vsyncadd %s368, %s373
          %s375 = smul.addr %s25, 2
          %s376 = smul.addr %s375, 128
          %s377 = scalar_lea.hbm %s0, %s376
          %s378 = sshll.u32 %s371, 4
          %s379 = int_to_ptr.vmem [resolvable:$true] %s378
          %384 = dma.hbm_to_vmem [thread:$0]  %s377, 256, %s379, %s368, 128, 128, 8
        $region52: #{tpu_custom_call.1} parent=47 // pred_fallthru
          _
      $region48: #{tpu_custom_call.1} parent=5 // pred_fallthru
        _
      %p385 = scmp.le.s32.totalorder 1, %s25
      %p386 = scmp.lt.s32.totalorder %s25, 3
      %p387 = pnand %p385, %p386
      %p388 = pneg %p387
      // Predicated region
      $region53: #{tpu_custom_call.1} parent=5 // pred_check
        _
      $region54: #{tpu_custom_call.1} parent=5 // pred_check_branch
        %390 = sbr.rel (%p387) target = $region56
      $region55: #{tpu_custom_call.1} parent=5 // pred_region
        %s391 = ssub.s32 %s25, 1
        %s392 = sand.u32 %s38, 1
        %s393 = scalar_lea.sflag [#allocation3], %s392
        %s394 = sand.u32 %s38, 1
        %s395 = smul.addr %s394, 16
        %s396 = scalar_lea.vmem [#allocation2], %s395
        // Predicated region
        $region57: #{tpu_custom_call.1} parent=55 // pred_check
          %p397 = pneg %p51
        $region58: #{tpu_custom_call.1} parent=55 // pred_check_branch
          %399 = sbr.rel (%p397) target = $region60
        $region59: #{tpu_custom_call.1} parent=55 // pred_region
          %400 = dma.done %s393, 256
        $region60: #{tpu_custom_call.1} parent=55 // pred_fallthru
          _
        // Predicated region
        $region61: #{tpu_custom_call.1} parent=55 // pred_check
          %p401 = pneg %p72
        $region62: #{tpu_custom_call.1} parent=55 // pred_check_branch
          %403 = sbr.rel (%p401) target = $region64
        $region63: #{tpu_custom_call.1} parent=55 // pred_region
          %404 = dma.done [#allocation6], 256
        $region64: #{tpu_custom_call.1} parent=55 // pred_fallthru
          _
        // Predicated region
        $region65: #{tpu_custom_call.1} parent=55 // pred_check
          %p405 = pneg %p93
        $region66: #{tpu_custom_call.1} parent=55 // pred_check_branch
          %407 = sbr.rel (%p405) target = $region68
        $region67: #{tpu_custom_call.1} parent=55 // pred_region
          %408 = dma.done [#allocation6], 512
        $region68: #{tpu_custom_call.1} parent=55 // pred_fallthru
          _
        // Predicated region
        $region69: #{tpu_custom_call.1} parent=55 // pred_check
          %p409 = pneg %p114
        $region70: #{tpu_custom_call.1} parent=55 // pred_check_branch
          %411 = sbr.rel (%p409) target = $region72
        $region71: #{tpu_custom_call.1} parent=55 // pred_region
          %412 = dma.done [#allocation9], 1024
        $region72: #{tpu_custom_call.1} parent=55 // pred_fallthru
          _
        // Predicated region
        $region73: #{tpu_custom_call.1} parent=55 // pred_check
          %p413 = pneg %p135
        $region74: #{tpu_custom_call.1} parent=55 // pred_check_branch
          %415 = sbr.rel (%p413) target = $region76
        $region75: #{tpu_custom_call.1} parent=55 // pred_region
          %416 = dma.done [#allocation9], 1024
        $region76: #{tpu_custom_call.1} parent=55 // pred_fallthru
          _
        // Predicated region
        $region77: #{tpu_custom_call.1} parent=55 // pred_check
          %p417 = pneg %p156
        $region78: #{tpu_custom_call.1} parent=55 // pred_check_branch
          %419 = sbr.rel (%p417) target = $region80
        $region79: #{tpu_custom_call.1} parent=55 // pred_region
          %420 = dma.done [#allocation12], 1024
        $region80: #{tpu_custom_call.1} parent=55 // pred_fallthru
          _
        // Predicated region
        $region81: #{tpu_custom_call.1} parent=55 // pred_check
          %p421 = pneg %p177
        $region82: #{tpu_custom_call.1} parent=55 // pred_check_branch
          %423 = sbr.rel (%p421) target = $region84
        $region83: #{tpu_custom_call.1} parent=55 // pred_region
          %424 = dma.done [#allocation12], 1024
        $region84: #{tpu_custom_call.1} parent=55 // pred_fallthru
          _
        // Predicated region
        $region85: #{tpu_custom_call.1} parent=55 // pred_check
          %p425 = pneg %p198
        $region86: #{tpu_custom_call.1} parent=55 // pred_check_branch
          %427 = sbr.rel (%p425) target = $region88
        $region87: #{tpu_custom_call.1} parent=55 // pred_region
          %428 = dma.done [#allocation15], 32
        $region88: #{tpu_custom_call.1} parent=55 // pred_fallthru
          _
        // Predicated region
        $region89: #{tpu_custom_call.1} parent=55 // pred_check
          %p429 = pneg %p219
        $region90: #{tpu_custom_call.1} parent=55 // pred_check_branch
          %431 = sbr.rel (%p429) target = $region92
        $region91: #{tpu_custom_call.1} parent=55 // pred_region
          %432 = dma.done [#allocation15], 64
        $region92: #{tpu_custom_call.1} parent=55 // pred_fallthru
          _
        %s433 = sand.u32 %s38, 1
        %s434 = scalar_lea.sflag [#allocation3], %s433
        %s435 = sand.u32 %s38, 1
        %s436 = smul.addr %s435, 16
        %s437 = scalar_lea.vmem [#allocation2], %s436
        %p438 = pneg %p51
        %p439 = pneg %p48
        %p440 = pneg %p72
        %p441 = pneg %p69
        %p442 = pneg %p93
        %p443 = pneg %p90
        %p444 = pneg %p114
        %p445 = pneg %p111
        %p446 = pneg %p135
        %p447 = pneg %p132
        %p448 = pneg %p156
        %p449 = pneg %p153
        %p450 = pneg %p177
        %p451 = pneg %p174
        %p452 = pneg %p198
        %p453 = pneg %p195
        %p454 = pneg %p219
        %p455 = pneg %p216
        %p456 = pneg %p245
        %p457 = pneg %p242
        %s458 = sand.u32 %s232, 1
        %s459 = scalar_lea.sflag [#allocation4], %s458
        %s460 = sand.u32 %s232, 1
        %s461 = smul.addr %s460, 4
        %s462 = scalar_lea.vmem [#allocation17], %s461
        %v464 = vld [vmem:[%s396] sm:$0xff]
        %v465 = vld [vmem:[%s396 + $0x8] sm:$0xff]
        %v466 = vpack.c.bf16 %v465, %v464
        %v467 = vld [vmem:[#allocation5] sm:$0xf]
        %v468 = vld [vmem:[#allocation5 + $0x4] sm:$0xf]
        %v469 = vld [vmem:[#allocation5 + $0x8] sm:$0xf]
        %v470 = vld [vmem:[#allocation5 + $0xc] sm:$0xf]
        %v471 = vld [vmem:[#allocation7] sm:$0xff]
        %v472 = vld [vmem:[#allocation7 + $0x8] sm:$0xff]
        %v473 = vld [vmem:[#allocation7 + $0x10] sm:$0xff]
        %v474 = vld [vmem:[#allocation7 + $0x18] sm:$0xff]
        %476 = vset.pattern.permute.xlu0 0
        %477 = vperm.xlu0 %476, %v471
        %v478 = vpop.permute.xlu0 %477
        %481 = vset.pattern.permute.xlu0 0
        %482 = vperm.xlu0 %481, %v472
        %v483 = vpop.permute.xlu0 %482
        %486 = vset.pattern.permute.xlu0 0
        %487 = vperm.xlu0 %486, %v473
        %v488 = vpop.permute.xlu0 %487
        %491 = vset.pattern.permute.xlu0 0
        %492 = vperm.xlu0 %491, %v474
        %v493 = vpop.permute.xlu0 %492
        %v499 = vunpack.c.l.b16 %v467
        %v500 = vunpack.c.l.b16 %v468
        %v501 = vunpack.c.l.b16 %v469
        %v502 = vunpack.c.l.b16 %v470
        %v503 = vpack.c.b16 %v500, %v499
        %v504 = vpack.c.b16 %v502, %v501
        %vm505 = vcmask 130048
        %v507 = vsel %vm505, %v503, 0
        %v510 = vsel %vm505, %v504, 0
        %512 = vmatprep.subr.bf16.mxu0 0
        %513 = vmatpush1.bf16.msra.mxu0 %v466
        %514 = vmatprep.subr.bf16.mxu0 0
        %515 = vmatpush1.bf16.msra.mxu0 0
        %516 = vmatprep.subr.bf16.mxu0 0
        %517 = vmatpush1.bf16.msra.mxu0 0
        %518 = vmatprep.subr.bf16.mxu0 0
        %519 = vmatpush1.bf16.msra.mxu0 0
        %520 = vmatprep.subr.bf16.mxu0 0
        %521 = vmatpush1.bf16.msra.mxu0 0
        %522 = vmatprep.subr.bf16.mxu0 0
        %523 = vmatpush1.bf16.msra.mxu0 0
        %524 = vmatprep.subr.bf16.mxu0 0
        %525 = vmatpush1.bf16.msra.mxu0 0
        %526 = vmatprep.subr.bf16.mxu0 0
        %527 = vmatpush1.bf16.msra.mxu0 0
        %528 = vmatprep.subr.bf16.mxu0 0
        %529 = vmatpush1.bf16.msra.mxu0 0
        %530 = vmatprep.subr.bf16.mxu0 0
        %531 = vmatpush1.bf16.msra.mxu0 0
        %532 = vmatprep.subr.bf16.mxu0 0
        %533 = vmatpush1.bf16.msra.mxu0 0
        %534 = vmatprep.subr.bf16.mxu0 0
        %535 = vmatpush1.bf16.msra.mxu0 0
        %536 = vmatprep.subr.bf16.mxu0 0
        %537 = vmatpush1.bf16.msra.mxu0 0
        %538 = vmatprep.subr.bf16.mxu0 0
        %539 = vmatpush1.bf16.msra.mxu0 0
        %540 = vmatprep.subr.bf16.mxu0 0
        %541 = vmatpush1.bf16.msra.mxu0 0
        %542 = vmatprep.subr.bf16.mxu0 0
        %543 = vmatpush1.bf16.msra.mxu0 0
        %544 = vmatprep.mubr.bf16.mxu0 0
        %545 = vmatmul.mubr.bf16.gmra.mrb[0].mxu0 %v507
        %v546 = vpop.f32.mrb[0].mxu0
        %v547 = vadd.f32 %v478, %v546
        %v548 = vpop.f32.mrb[0].mxu0
        %v549 = vpop.f32.mrb[0].mxu0
        %v550 = vadd.f32 %v483, %v549
        %v551 = vpop.f32.mrb[0].mxu0
        %552 = vmatprep.mubr.bf16.mxu0 0
        %553 = vmatmul.mubr.bf16.gmra.mrb[0].mxu0 %v510
        %v554 = vpop.f32.mrb[0].mxu0
        %v555 = vadd.f32 %v488, %v554
        %v556 = vpop.f32.mrb[0].mxu0
        %v557 = vpop.f32.mrb[0].mxu0
        %v558 = vadd.f32 %v493, %v557
        %v559 = vpop.f32.mrb[0].mxu0
        %560 = vdwg.mxu0
        loop: start=0, step=1, limit=2
        $region93: #{tpu_custom_call.1} parent=55 // loop_pre_header
          _
        $region94: #{tpu_custom_call.1} parent=55 // loop_header
          %s562 = sphi 0, %s566
          %p563 = scmp.ge.s32.totalorder %s562, 2
          %v567 = vphi %v547, %v1115
          %v568 = vphi %v550, %v1116
          %v569 = vphi %v555, %v1117
          %v570 = vphi %v558, %v1118
        $region95: #{tpu_custom_call.1} parent=55 // loop_header_branch
          %565 = sbr.rel (%p563) target = $region99
        $region96: #{tpu_custom_call.1} parent=55 // loop_body
          %v571 = vmul.f32 %v567, 0.5
          %v572 = vmul.f32 %v568, 0.5
          %v573 = vmul.f32 %v569, 0.5
          %v574 = vmul.f32 %v570, 0.5
          %v575 = vmul.f32 %v567, 0.70710677
          %v576 = vmul.f32 %v568, 0.70710677
          %v577 = vmul.f32 %v569, 0.70710677
          %v578 = vmul.f32 %v570, 0.70710677
          %v579 = vand.u32 2147483647, %v575
          %v580 = vand.u32 2147483647, %v576
          %v581 = vand.u32 2147483647, %v577
          %v582 = vand.u32 2147483647, %v578
          %v583 = vmul.f32 %v579, 0.3275911
          %v584 = vmul.f32 %v580, 0.3275911
          %v585 = vmul.f32 %v581, 0.3275911
          %v586 = vmul.f32 %v582, 0.3275911
          %v587 = vadd.f32 %v583, 1.0
          %v588 = vadd.f32 %v584, 1.0
          %v589 = vadd.f32 %v585, 1.0
          %v590 = vadd.f32 %v586, 1.0
          %v591 = vrcp.pop %v587
          %v592 = vmul.f32 1.0, %v591
          %v593 = vrcp.pop %v588
          %v594 = vmul.f32 1.0, %v593
          %v595 = vrcp.pop %v589
          %v596 = vmul.f32 1.0, %v595
          %v597 = vrcp.pop %v590
          %v598 = vmul.f32 1.0, %v597
          %v599 = vmul.f32 %v592, 1.0614054
          %v600 = vmul.f32 %v594, 1.0614054
          %v601 = vmul.f32 %v596, 1.0614054
          %v602 = vmul.f32 %v598, 1.0614054
          %v603 = vadd.f32 %v599, -1.4531521
          %v604 = vadd.f32 %v600, -1.4531521
          %v605 = vadd.f32 %v601, -1.4531521
          %v606 = vadd.f32 %v602, -1.4531521
          %v607 = vmul.f32 %v603, %v592
          %v608 = vmul.f32 %v604, %v594
          %v609 = vmul.f32 %v605, %v596
          %v610 = vmul.f32 %v606, %v598
          %v611 = vadd.f32 %v607, 1.4214138
          %v612 = vadd.f32 %v608, 1.4214138
          %v613 = vadd.f32 %v609, 1.4214138
          %v614 = vadd.f32 %v610, 1.4214138
          %v615 = vmul.f32 %v611, %v592
          %v616 = vmul.f32 %v612, %v594
          %v617 = vmul.f32 %v613, %v596
          %v618 = vmul.f32 %v614, %v598
          %v619 = vadd.f32 %v615, -0.28449672
          %v620 = vadd.f32 %v616, -0.28449672
          %v621 = vadd.f32 %v617, -0.28449672
          %v622 = vadd.f32 %v618, -0.28449672
          %v623 = vmul.f32 %v619, %v592
          %v624 = vmul.f32 %v620, %v594
          %v625 = vmul.f32 %v621, %v596
          %v626 = vmul.f32 %v622, %v598
          %v627 = vadd.f32 %v623, 0.2548296
          %v628 = vadd.f32 %v624, 0.2548296
          %v629 = vadd.f32 %v625, 0.2548296
          %v630 = vadd.f32 %v626, 0.2548296
          %v631 = vmul.f32 %v627, %v592
          %v632 = vmul.f32 %v628, %v594
          %v633 = vmul.f32 %v629, %v596
          %v634 = vmul.f32 %v630, %v598
          %v635 = vsub.f32 0.0, %v579
          %v636 = vsub.f32 0.0, %v580
          %v637 = vsub.f32 0.0, %v581
          %v638 = vsub.f32 0.0, %v582
          %v639 = vmul.f32 %v635, %v579
          %v640 = vmul.f32 %v636, %v580
          %v641 = vmul.f32 %v637, %v581
          %v642 = vmul.f32 %v638, %v582
          %v643 = vmul.f32 %v639, 1.442695
          %v644 = vpow.pop %v643
          %v645 = vmul.f32 %v640, 1.442695
          %v646 = vpow.pop %v645
          %v647 = vmul.f32 %v641, 1.442695
          %v648 = vpow.pop %v647
          %v649 = vmul.f32 %v642, 1.442695
          %v650 = vpow.pop %v649
          %v651 = vmul.f32 %v631, %v644
          %v652 = vmul.f32 %v632, %v646
          %v653 = vmul.f32 %v633, %v648
          %v654 = vmul.f32 %v634, %v650
          %v655 = vsub.f32 1.0, %v651
          %v656 = vsub.f32 1.0, %v652
          %v657 = vsub.f32 1.0, %v653
          %v658 = vsub.f32 1.0, %v654
          %vm659 = vcmp.ge.f32.partialorder %v575, 0.0
          %vm660 = vcmp.ge.f32.partialorder %v576, 0.0
          %vm661 = vcmp.ge.f32.partialorder %v577, 0.0
          %vm662 = vcmp.ge.f32.partialorder %v578, 0.0
          %v663 = vsub.f32 0.0, %v655
          %v664 = vsub.f32 0.0, %v656
          %v665 = vsub.f32 0.0, %v657
          %v666 = vsub.f32 0.0, %v658
          %v667 = vsel %vm659, %v655, %v663
          %v668 = vsel %vm660, %v656, %v664
          %v669 = vsel %vm661, %v657, %v665
          %v670 = vsel %vm662, %v658, %v666
          %v671 = vadd.f32 %v667, 1.0
          %v672 = vadd.f32 %v668, 1.0
          %v673 = vadd.f32 %v669, 1.0
          %v674 = vadd.f32 %v670, 1.0
          %v675 = vmul.f32 %v571, %v671
          %v676 = vmul.f32 %v572, %v672
          %v677 = vmul.f32 %v573, %v673
          %v678 = vmul.f32 %v574, %v674
          %v679 = vpack.c.bf16 %v676, %v675
          %v680 = vpack.c.bf16 %v678, %v677
          %s681 = smul.u32 %s562, 8
          %s682 = smul.addr %s681, 4
          %s683 = scalar_lea.vmem [#allocation8], %s682
          %v684 = vld [vmem:[%s683] sm:$0xff]
          %v685 = vld [vmem:[%s683 + $0x8] sm:$0xff]
          %v686 = vld [vmem:[%s683 + $0x10] sm:$0xff]
          %v687 = vld [vmem:[%s683 + $0x18] sm:$0xff]
          %690 = vrot.lane.b32.xlu0 %v679, 2
          %v691 = vpop.permute.xlu0 %690
          %692 = vrot.lane.b32.xlu0 %v680, 2
          %v693 = vpop.permute.xlu0 %692
          %vm694 = vcmask 15360
          %v697 = vsel %vm694, 0, %v691
          %v700 = vsel %vm694, 0, %v693
          %v702 = vsel %vm694, %v691, 0
          %v703 = vsel %vm694, %v693, 0
          %708 = vrot.lane.b32.xlu0 %v697, 127
          %v709 = vpop.permute.xlu0 %708
          %710 = vrot.lane.b32.xlu0 %v702, 127
          %v711 = vpop.permute.xlu0 %710
          %712 = vrot.lane.b32.xlu0 %v700, 127
          %v713 = vpop.permute.xlu0 %712
          %714 = vrot.lane.b32.xlu0 %v703, 127
          %v715 = vpop.permute.xlu0 %714
          %vm716 = vcmask 1039360
          %v717 = vsel %vm716, %v709, %v711
          %v718 = vsel %vm716, %v713, %v715
          %721 = vrot.lane.b32.xlu0 %v697, 125
          %v722 = vpop.permute.xlu0 %721
          %723 = vrot.lane.b32.xlu0 %v702, 125
          %v724 = vpop.permute.xlu0 %723
          %725 = vrot.lane.b32.xlu0 %v700, 125
          %v726 = vpop.permute.xlu0 %725
          %727 = vrot.lane.b32.xlu0 %v703, 125
          %v728 = vpop.permute.xlu0 %727
          %vm729 = vcmask 1022976
          %v730 = vsel %vm729, %v722, %v724
          %v731 = vsel %vm729, %v726, %v728
          %734 = vrot.lane.b32.xlu0 %v697, 124
          %v735 = vpop.permute.xlu0 %734
          %736 = vrot.lane.b32.xlu0 %v702, 124
          %v737 = vpop.permute.xlu0 %736
          %738 = vrot.lane.b32.xlu0 %v700, 124
          %v739 = vpop.permute.xlu0 %738
          %740 = vrot.lane.b32.xlu0 %v703, 124
          %v741 = vpop.permute.xlu0 %740
          %vm742 = vcmask 1014784
          %v743 = vsel %vm742, %v735, %v737
          %v744 = vsel %vm742, %v739, %v741
          %s747 = smul.u32 %s562, 32
          %s748 = scalar_lea.vmem [#allocation10], %s747
          %v749 = vld [vmem:[%s748] sm:$0xff]
          %v750 = vld [vmem:[%s748 + $0x8] sm:$0xff]
          %v751 = vld [vmem:[%s748 + $0x10] sm:$0xff]
          %v752 = vld [vmem:[%s748 + $0x18] sm:$0xff]
          %754 = vset.pattern.permute.xlu0 0
          %755 = vperm.xlu0 %754, %v749
          %v756 = vpop.permute.xlu0 %755
          %759 = vset.pattern.permute.xlu0 0
          %760 = vperm.xlu0 %759, %v750
          %v761 = vpop.permute.xlu0 %760
          %764 = vset.pattern.permute.xlu0 0
          %765 = vperm.xlu0 %764, %v751
          %v766 = vpop.permute.xlu0 %765
          %769 = vset.pattern.permute.xlu0 0
          %770 = vperm.xlu0 %769, %v752
          %v771 = vpop.permute.xlu0 %770
          %v777 = vunpack.c.l.b16 %v684
          %v778 = vunpack.c.h.b16 %v684
          %v779 = vunpack.c.l.b16 %v685
          %v780 = vunpack.c.h.b16 %v685
          %v781 = vunpack.c.l.b16 %v686
          %v782 = vunpack.c.h.b16 %v686
          %v783 = vunpack.c.l.b16 %v687
          %v784 = vunpack.c.h.b16 %v687
          %v785 = vpack.c.b16 %v779, %v777
          %v786 = vpack.c.b16 %v780, %v778
          %v787 = vpack.c.b16 %v783, %v781
          %v788 = vpack.c.b16 %v784, %v782
          %vm791 = vcmask 261120
          %v793 = vsel %vm791, %v786, 0
          %v796 = vsel %vm791, %v788, 0
          %798 = vmatprep.subr.bf16.mxu0 0
          %799 = vmatpush1.bf16.msra.mxu0 %v697
          %800 = vmatprep.subr.bf16.mxu0 0
          %801 = vmatpush1.bf16.msra.mxu0 %v700
          %802 = vmatprep.subr.bf16.mxu0 0
          %803 = vmatpush1.bf16.msra.mxu0 %v717
          %804 = vmatprep.subr.bf16.mxu0 0
          %805 = vmatpush1.bf16.msra.mxu0 %v718
          %806 = vmatprep.subr.bf16.mxu0 0
          %807 = vmatpush1.bf16.msra.mxu0 %v679
          %808 = vmatprep.subr.bf16.mxu0 0
          %809 = vmatpush1.bf16.msra.mxu0 %v680
          %810 = vmatprep.subr.bf16.mxu0 0
          %811 = vmatpush1.bf16.msra.mxu0 %v730
          %812 = vmatprep.subr.bf16.mxu0 0
          %813 = vmatpush1.bf16.msra.mxu0 %v731
          %814 = vmatprep.subr.bf16.mxu0 0
          %815 = vmatpush1.bf16.msra.mxu0 %v743
          %816 = vmatprep.subr.bf16.mxu0 0
          %817 = vmatpush1.bf16.msra.mxu0 %v744
          %818 = vmatprep.subr.bf16.mxu0 0
          %819 = vmatpush1.bf16.msra.mxu0 0
          %820 = vmatprep.subr.bf16.mxu0 0
          %821 = vmatpush1.bf16.msra.mxu0 0
          %822 = vmatprep.subr.bf16.mxu0 0
          %823 = vmatpush1.bf16.msra.mxu0 0
          %824 = vmatprep.subr.bf16.mxu0 0
          %825 = vmatpush1.bf16.msra.mxu0 0
          %826 = vmatprep.subr.bf16.mxu0 0
          %827 = vmatpush1.bf16.msra.mxu0 0
          %828 = vmatprep.subr.bf16.mxu0 0
          %829 = vmatpush1.bf16.msra.mxu0 0
          %830 = vmatprep.mubr.bf16.mxu0 %v793
          %831 = vmatmul.mubr.bf16.gmra.mrb[0].mxu0 %v785
          %v832 = vpop.f32.mrb[0].mxu0
          %v833 = vadd.f32 %v756, %v832
          %v834 = vpop.f32.mrb[0].mxu0
          %v835 = vpop.f32.mrb[0].mxu0
          %v836 = vadd.f32 %v761, %v835
          %v837 = vpop.f32.mrb[0].mxu0
          %838 = vmatprep.mubr.bf16.mxu0 %v796
          %839 = vmatmul.mubr.bf16.gmra.mrb[0].mxu0 %v787
          %v840 = vpop.f32.mrb[0].mxu0
          %v841 = vadd.f32 %v766, %v840
          %v842 = vpop.f32.mrb[0].mxu0
          %v843 = vpop.f32.mrb[0].mxu0
          %v844 = vadd.f32 %v771, %v843
          %v845 = vpop.f32.mrb[0].mxu0
          %846 = vdwg.mxu0
          %v847 = vmul.f32 %v833, 0.5
          %v848 = vmul.f32 %v836, 0.5
          %v849 = vmul.f32 %v841, 0.5
          %v850 = vmul.f32 %v844, 0.5
          %v851 = vmul.f32 %v833, 0.70710677
          %v852 = vmul.f32 %v836, 0.70710677
          %v853 = vmul.f32 %v841, 0.70710677
          %v854 = vmul.f32 %v844, 0.70710677
          %v855 = vand.u32 2147483647, %v851
          %v856 = vand.u32 2147483647, %v852
          %v857 = vand.u32 2147483647, %v853
          %v858 = vand.u32 2147483647, %v854
          %v859 = vmul.f32 %v855, 0.3275911
          %v860 = vmul.f32 %v856, 0.3275911
          %v861 = vmul.f32 %v857, 0.3275911
          %v862 = vmul.f32 %v858, 0.3275911
          %v863 = vadd.f32 %v859, 1.0
          %v864 = vadd.f32 %v860, 1.0
          %v865 = vadd.f32 %v861, 1.0
          %v866 = vadd.f32 %v862, 1.0
          %v867 = vrcp.pop %v863
          %v868 = vmul.f32 1.0, %v867
          %v869 = vrcp.pop %v864
          %v870 = vmul.f32 1.0, %v869
          %v871 = vrcp.pop %v865
          %v872 = vmul.f32 1.0, %v871
          %v873 = vrcp.pop %v866
          %v874 = vmul.f32 1.0, %v873
          %v875 = vmul.f32 %v868, 1.0614054
          %v876 = vmul.f32 %v870, 1.0614054
          %v877 = vmul.f32 %v872, 1.0614054
          %v878 = vmul.f32 %v874, 1.0614054
          %v879 = vadd.f32 %v875, -1.4531521
          %v880 = vadd.f32 %v876, -1.4531521
          %v881 = vadd.f32 %v877, -1.4531521
          %v882 = vadd.f32 %v878, -1.4531521
          %v883 = vmul.f32 %v879, %v868
          %v884 = vmul.f32 %v880, %v870
          %v885 = vmul.f32 %v881, %v872
          %v886 = vmul.f32 %v882, %v874
          %v887 = vadd.f32 %v883, 1.4214138
          %v888 = vadd.f32 %v884, 1.4214138
          %v889 = vadd.f32 %v885, 1.4214138
          %v890 = vadd.f32 %v886, 1.4214138
          %v891 = vmul.f32 %v887, %v868
          %v892 = vmul.f32 %v888, %v870
          %v893 = vmul.f32 %v889, %v872
          %v894 = vmul.f32 %v890, %v874
          %v895 = vadd.f32 %v891, -0.28449672
          %v896 = vadd.f32 %v892, -0.28449672
          %v897 = vadd.f32 %v893, -0.28449672
          %v898 = vadd.f32 %v894, -0.28449672
          %v899 = vmul.f32 %v895, %v868
          %v900 = vmul.f32 %v896, %v870
          %v901 = vmul.f32 %v897, %v872
          %v902 = vmul.f32 %v898, %v874
          %v903 = vadd.f32 %v899, 0.2548296
          %v904 = vadd.f32 %v900, 0.2548296
          %v905 = vadd.f32 %v901, 0.2548296
          %v906 = vadd.f32 %v902, 0.2548296
          %v907 = vmul.f32 %v903, %v868
          %v908 = vmul.f32 %v904, %v870
          %v909 = vmul.f32 %v905, %v872
          %v910 = vmul.f32 %v906, %v874
          %v911 = vsub.f32 0.0, %v855
          %v912 = vsub.f32 0.0, %v856
          %v913 = vsub.f32 0.0, %v857
          %v914 = vsub.f32 0.0, %v858
          %v915 = vmul.f32 %v911, %v855
          %v916 = vmul.f32 %v912, %v856
          %v917 = vmul.f32 %v913, %v857
          %v918 = vmul.f32 %v914, %v858
          %v919 = vmul.f32 %v915, 1.442695
          %v920 = vpow.pop %v919
          %v921 = vmul.f32 %v916, 1.442695
          %v922 = vpow.pop %v921
          %v923 = vmul.f32 %v917, 1.442695
          %v924 = vpow.pop %v923
          %v925 = vmul.f32 %v918, 1.442695
          %v926 = vpow.pop %v925
          %v927 = vmul.f32 %v907, %v920
          %v928 = vmul.f32 %v908, %v922
          %v929 = vmul.f32 %v909, %v924
          %v930 = vmul.f32 %v910, %v926
          %v931 = vsub.f32 1.0, %v927
          %v932 = vsub.f32 1.0, %v928
          %v933 = vsub.f32 1.0, %v929
          %v934 = vsub.f32 1.0, %v930
          %vm935 = vcmp.ge.f32.partialorder %v851, 0.0
          %vm936 = vcmp.ge.f32.partialorder %v852, 0.0
          %vm937 = vcmp.ge.f32.partialorder %v853, 0.0
          %vm938 = vcmp.ge.f32.partialorder %v854, 0.0
          %v939 = vsub.f32 0.0, %v931
          %v940 = vsub.f32 0.0, %v932
          %v941 = vsub.f32 0.0, %v933
          %v942 = vsub.f32 0.0, %v934
          %v943 = vsel %vm935, %v931, %v939
          %v944 = vsel %vm936, %v932, %v940
          %v945 = vsel %vm937, %v933, %v941
          %v946 = vsel %vm938, %v934, %v942
          %v947 = vadd.f32 %v943, 1.0
          %v948 = vadd.f32 %v944, 1.0
          %v949 = vadd.f32 %v945, 1.0
          %v950 = vadd.f32 %v946, 1.0
          %v951 = vmul.f32 %v847, %v947
          %v952 = vmul.f32 %v848, %v948
          %v953 = vmul.f32 %v849, %v949
          %v954 = vmul.f32 %v850, %v950
          %v955 = vpack.c.bf16 %v952, %v951
          %v956 = vpack.c.bf16 %v954, %v953
          %s957 = smul.addr %s681, 4
          %s958 = scalar_lea.vmem [#allocation11], %s957
          %v959 = vld [vmem:[%s958] sm:$0xff]
          %v960 = vld [vmem:[%s958 + $0x8] sm:$0xff]
          %v961 = vld [vmem:[%s958 + $0x10] sm:$0xff]
          %v962 = vld [vmem:[%s958 + $0x18] sm:$0xff]
          %965 = vrot.lane.b32.xlu0 %v955, 2
          %v966 = vpop.permute.xlu0 %965
          %967 = vrot.lane.b32.xlu0 %v956, 2
          %v968 = vpop.permute.xlu0 %967
          %v970 = vsel %vm694, 0, %v966
          %v973 = vsel %vm694, 0, %v968
          %v975 = vsel %vm694, %v966, 0
          %v976 = vsel %vm694, %v968, 0
          %981 = vrot.lane.b32.xlu0 %v970, 127
          %v982 = vpop.permute.xlu0 %981
          %983 = vrot.lane.b32.xlu0 %v975, 127
          %v984 = vpop.permute.xlu0 %983
          %985 = vrot.lane.b32.xlu0 %v973, 127
          %v986 = vpop.permute.xlu0 %985
          %987 = vrot.lane.b32.xlu0 %v976, 127
          %v988 = vpop.permute.xlu0 %987
          %v989 = vsel %vm716, %v982, %v984
          %v990 = vsel %vm716, %v986, %v988
          %993 = vrot.lane.b32.xlu0 %v970, 125
          %v994 = vpop.permute.xlu0 %993
          %995 = vrot.lane.b32.xlu0 %v975, 125
          %v996 = vpop.permute.xlu0 %995
          %997 = vrot.lane.b32.xlu0 %v973, 125
          %v998 = vpop.permute.xlu0 %997
          %999 = vrot.lane.b32.xlu0 %v976, 125
          %v1000 = vpop.permute.xlu0 %999
          %v1001 = vsel %vm729, %v994, %v996
          %v1002 = vsel %vm729, %v998, %v1000
          %1005 = vrot.lane.b32.xlu0 %v970, 124
          %v1006 = vpop.permute.xlu0 %1005
          %1007 = vrot.lane.b32.xlu0 %v975, 124
          %v1008 = vpop.permute.xlu0 %1007
          %1009 = vrot.lane.b32.xlu0 %v973, 124
          %v1010 = vpop.permute.xlu0 %1009
          %1011 = vrot.lane.b32.xlu0 %v976, 124
          %v1012 = vpop.permute.xlu0 %1011
          %v1013 = vsel %vm742, %v1006, %v1008
          %v1014 = vsel %vm742, %v1010, %v1012
          %s1017 = scalar_lea.vmem [#allocation13], %s747
          %v1018 = vld [vmem:[%s1017] sm:$0xff]
          %v1019 = vld [vmem:[%s1017 + $0x8] sm:$0xff]
          %v1020 = vld [vmem:[%s1017 + $0x10] sm:$0xff]
          %v1021 = vld [vmem:[%s1017 + $0x18] sm:$0xff]
          %1023 = vset.pattern.permute.xlu0 0
          %1024 = vperm.xlu0 %1023, %v1018
          %v1025 = vpop.permute.xlu0 %1024
          %1028 = vset.pattern.permute.xlu0 0
          %1029 = vperm.xlu0 %1028, %v1019
          %v1030 = vpop.permute.xlu0 %1029
          %1033 = vset.pattern.permute.xlu0 0
          %1034 = vperm.xlu0 %1033, %v1020
          %v1035 = vpop.permute.xlu0 %1034
          %1038 = vset.pattern.permute.xlu0 0
          %1039 = vperm.xlu0 %1038, %v1021
          %v1040 = vpop.permute.xlu0 %1039
          %v1046 = vunpack.c.l.b16 %v959
          %v1047 = vunpack.c.h.b16 %v959
          %v1048 = vunpack.c.l.b16 %v960
          %v1049 = vunpack.c.h.b16 %v960
          %v1050 = vunpack.c.l.b16 %v961
          %v1051 = vunpack.c.h.b16 %v961
          %v1052 = vunpack.c.l.b16 %v962
          %v1053 = vunpack.c.h.b16 %v962
          %v1054 = vpack.c.b16 %v1048, %v1046
          %v1055 = vpack.c.b16 %v1049, %v1047
          %v1056 = vpack.c.b16 %v1052, %v1050
          %v1057 = vpack.c.b16 %v1053, %v1051
          %v1061 = vsel %vm791, %v1055, 0
          %v1064 = vsel %vm791, %v1057, 0
          %1066 = vmatprep.subr.bf16.mxu0 0
          %1067 = vmatpush1.bf16.msra.mxu0 %v970
          %1068 = vmatprep.subr.bf16.mxu0 0
          %1069 = vmatpush1.bf16.msra.mxu0 %v973
          %1070 = vmatprep.subr.bf16.mxu0 0
          %1071 = vmatpush1.bf16.msra.mxu0 %v989
          %1072 = vmatprep.subr.bf16.mxu0 0
          %1073 = vmatpush1.bf16.msra.mxu0 %v990
          %1074 = vmatprep.subr.bf16.mxu0 0
          %1075 = vmatpush1.bf16.msra.mxu0 %v955
          %1076 = vmatprep.subr.bf16.mxu0 0
          %1077 = vmatpush1.bf16.msra.mxu0 %v956
          %1078 = vmatprep.subr.bf16.mxu0 0
          %1079 = vmatpush1.bf16.msra.mxu0 %v1001
          %1080 = vmatprep.subr.bf16.mxu0 0
          %1081 = vmatpush1.bf16.msra.mxu0 %v1002
          %1082 = vmatprep.subr.bf16.mxu0 0
          %1083 = vmatpush1.bf16.msra.mxu0 %v1013
          %1084 = vmatprep.subr.bf16.mxu0 0
          %1085 = vmatpush1.bf16.msra.mxu0 %v1014
          %1086 = vmatprep.subr.bf16.mxu0 0
          %1087 = vmatpush1.bf16.msra.mxu0 0
          %1088 = vmatprep.subr.bf16.mxu0 0
          %1089 = vmatpush1.bf16.msra.mxu0 0
          %1090 = vmatprep.subr.bf16.mxu0 0
          %1091 = vmatpush1.bf16.msra.mxu0 0
          %1092 = vmatprep.subr.bf16.mxu0 0
          %1093 = vmatpush1.bf16.msra.mxu0 0
          %1094 = vmatprep.subr.bf16.mxu0 0
          %1095 = vmatpush1.bf16.msra.mxu0 0
          %1096 = vmatprep.subr.bf16.mxu0 0
          %1097 = vmatpush1.bf16.msra.mxu0 0
          %1098 = vmatprep.mubr.bf16.mxu0 %v1061
          %1099 = vmatmul.mubr.bf16.gmra.mrb[0].mxu0 %v1054
          %v1100 = vpop.f32.mrb[0].mxu0
          %v1101 = vadd.f32 %v1025, %v1100
          %v1102 = vpop.f32.mrb[0].mxu0
          %v1103 = vpop.f32.mrb[0].mxu0
          %v1104 = vadd.f32 %v1030, %v1103
          %v1105 = vpop.f32.mrb[0].mxu0
          %1106 = vmatprep.mubr.bf16.mxu0 %v1064
          %1107 = vmatmul.mubr.bf16.gmra.mrb[0].mxu0 %v1056
          %v1108 = vpop.f32.mrb[0].mxu0
          %v1109 = vadd.f32 %v1035, %v1108
          %v1110 = vpop.f32.mrb[0].mxu0
          %v1111 = vpop.f32.mrb[0].mxu0
          %v1112 = vadd.f32 %v1040, %v1111
          %v1113 = vpop.f32.mrb[0].mxu0
          %1114 = vdwg.mxu0
          %v1115 = vadd.f32 %v1101, %v567
          %v1116 = vadd.f32 %v1104, %v568
          %v1117 = vadd.f32 %v1109, %v569
          %v1118 = vadd.f32 %v1112, %v570
        $region97: #{tpu_custom_call.1} parent=55 // loop_footer
          %s566 = sadd.s32 1, %s562
        $region98: #{tpu_custom_call.1} parent=55 // loop_footer_branch
          %561 = sbr.rel target = $region94
        $region99: #{tpu_custom_call.1} parent=55 // loop_exit
          _
        %v1119 = vld [vmem:[#allocation14] sm:$0x3]
        %v1120 = vpack.c.bf16 %v568, %v567
        %v1121 = vpack.c.bf16 %v570, %v569
        %v1122 = vld [vmem:[#allocation16] sm:$0xf]
        %1124 = vset.pattern.permute.xlu0 0
        %1125 = vperm.xlu0 %1124, %v1122
        %v1126 = vpop.permute.xlu0 %1125
        %vm1128 = vcmask 261120
        %v1130 = vsel %vm1128, %v1119, 0
        %1132 = vmatprep.subr.bf16.mxu0 0
        %1133 = vmatpush1.bf16.msra.mxu0 %v1120
        %1134 = vmatprep.subr.bf16.mxu0 0
        %1135 = vmatpush1.bf16.msra.mxu0 %v1121
        %1136 = vmatprep.subr.bf16.mxu0 0
        %1137 = vmatpush1.bf16.msra.mxu0 0
        %1138 = vmatprep.subr.bf16.mxu0 0
        %1139 = vmatpush1.bf16.msra.mxu0 0
        %1140 = vmatprep.subr.bf16.mxu0 0
        %1141 = vmatpush1.bf16.msra.mxu0 0
        %1142 = vmatprep.subr.bf16.mxu0 0
        %1143 = vmatpush1.bf16.msra.mxu0 0
        %1144 = vmatprep.subr.bf16.mxu0 0
        %1145 = vmatpush1.bf16.msra.mxu0 0
        %1146 = vmatprep.subr.bf16.mxu0 0
        %1147 = vmatpush1.bf16.msra.mxu0 0
        %1148 = vmatprep.subr.bf16.mxu0 0
        %1149 = vmatpush1.bf16.msra.mxu0 0
        %1150 = vmatprep.subr.bf16.mxu0 0
        %1151 = vmatpush1.bf16.msra.mxu0 0
        %1152 = vmatprep.subr.bf16.mxu0 0
        %1153 = vmatpush1.bf16.msra.mxu0 0
        %1154 = vmatprep.subr.bf16.mxu0 0
        %1155 = vmatpush1.bf16.msra.mxu0 0
        %1156 = vmatprep.subr.bf16.mxu0 0
        %1157 = vmatpush1.bf16.msra.mxu0 0
        %1158 = vmatprep.subr.bf16.mxu0 0
        %1159 = vmatpush1.bf16.msra.mxu0 0
        %1160 = vmatprep.subr.bf16.mxu0 0
        %1161 = vmatpush1.bf16.msra.mxu0 0
        %1162 = vmatprep.subr.bf16.mxu0 0
        %1163 = vmatpush1.bf16.msra.mxu0 0
        %1164 = vmatprep.mubr.bf16.mxu0 0
        %1165 = vmatmul.mubr.bf16.gmra.mrb[0].mxu0 %v1130
        %v1166 = vpop.f32.mrb[0].mxu0
        %v1167 = vadd.f32 %v1126, %v1166
        %v1168 = vpop.f32.mrb[0].mxu0
        %v1169 = vpop.f32.mrb[0].mxu0
        %v1170 = vpop.f32.mrb[0].mxu0
        %1171 = vdwg.mxu0
        %1172 = vst [vmem:[%s462] sm:$0xf] %v1167
        %s1173 = sand.u32 %s232, 1
        %s1174 = scalar_lea.sflag [#allocation4], %s1173
        %s1175 = sand.u32 %s232, 1
        %s1176 = smul.addr %s1175, 4
        %s1177 = scalar_lea.vmem [#allocation17], %s1176
        // Predicated region
        $region100: #{tpu_custom_call.1} parent=55 // pred_check
          %p1178 = pneg %p242
        $region101: #{tpu_custom_call.1} parent=55 // pred_check_branch
          %1180 = sbr.rel (%p1178) target = $region103
        $region102: #{tpu_custom_call.1} parent=55 // pred_region
          %s1182 = ssub.s32 64, 64
          %1183 = vsyncadd %s1174, %s1182
          %s1184 = smul.addr %s30, 64
          %s1185 = scalar_lea.hbm %s9, %s1184
          %s1187 = sshll.u32 %s1177, 4
          %s1188 = int_to_ptr.vmem [resolvable:$true] %s1187
          %1190 = dma.vmem_to_hbm [thread:$0]  %s1188, 64, %s1185, %s1174
        $region103: #{tpu_custom_call.1} parent=55 // pred_fallthru
          _
      $region56: #{tpu_custom_call.1} parent=5 // pred_fallthru
        _
      %p1191 = scmp.le.s32.totalorder 2, %s25
      // Predicated region
      $region104: #{tpu_custom_call.1} parent=5 // pred_check
        %p1192 = pneg %p1191
      $region105: #{tpu_custom_call.1} parent=5 // pred_check_branch
        %1194 = sbr.rel (%p1192) target = $region107
      $region106: #{tpu_custom_call.1} parent=5 // pred_region
        %s1195 = ssub.s32 %s25, 2
        // Predicated region
        $region108: #{tpu_custom_call.1} parent=106 // pred_check
          %p1196 = pneg %p248
        $region109: #{tpu_custom_call.1} parent=106 // pred_check_branch
          %1198 = sbr.rel (%p1196) target = $region111
        $region110: #{tpu_custom_call.1} parent=106 // pred_region
          %s1199 = sand.u32 %s233, 1
          %s1200 = scalar_lea.sflag [#allocation4], %s1199
          %s1201 = sand.u32 %s233, 1
          %s1202 = smul.addr %s1201, 4
          %s1203 = scalar_lea.vmem [#allocation17], %s1202
          %1204 = dma.done %s1200, 64
        $region111: #{tpu_custom_call.1} parent=106 // pred_fallthru
          _
      $region107: #{tpu_custom_call.1} parent=5 // pred_fallthru
        _
    $region6: #{tpu_custom_call.1} parent=1 // loop_footer
      %s29 = sadd.s32 1, %s25
    $region7: #{tpu_custom_call.1} parent=1 // loop_footer_branch
      %24 = sbr.rel target = $region3
    $region8: #{tpu_custom_call.1} parent=1 // loop_exit
      _
    %1205 = vsyncpa [#allocation3], 1
    %s1206 = scalar_lea.sflag [#allocation3], 1
    %1207 = vsyncpa %s1206, 1
    %1208 = vsyncpa [#allocation6], 1
    %1209 = vsyncpa [#allocation9], 1
    %1210 = vsyncpa [#allocation12], 1
    %1211 = vsyncpa [#allocation15], 1
    %1212 = vsyncpa [#allocation4], 1
    %s1213 = scalar_lea.sflag [#allocation4], 1
    %1214 = vsyncpa %s1213, 1

</llo_original>
